<compile_context>
chip_gen: v7x
topology: tpu7x:2x2x1
jax: 0.10.0
libtpu: 0.0.40
codegen_flags: <defaults>
</compile_context>

<pallas_src>
import functools

import jax
import jax.numpy as jnp
from jax.experimental import pallas as pl
from jax.experimental.pallas import tpu as pltpu


def _round_up(x, m):
    return ((x + m - 1) // m) * m


# ---------------------------------------------------------------------------
# Pallas kernels
# ---------------------------------------------------------------------------
def _fused_local_kernel(xq_ref, glb_ref, mask_ref, w1_ref, b1_ref,
                        w2_ref, b2_ref, o_ref, rhs_ref, x2_ref, *, Wp, L1, L2):
    """conv3x3+bias+ReLU -> conv3x3+bias -> +glb -> +x for one image.

    xq_ref:  (1, C, Sp)    zero-padded input, flattened (H+2)*(W+2) row-major.
    glb_ref: (1, C, L2)    global-stream features, row pitch Wp (junk cols ignored).
    mask_ref:(1, L1)       1.0 where the conv1-evaluated position is an image pixel.
    w*_ref:  (C, 9C) bf16  tap-stacked conv weights (tap-major blocks of Cin rows).
    b*_ref:  (C, 1)  f32   conv biases.
    o_ref:   (1, C, L2)    output, lane-dense flat layout with row pitch Wp.
    rhs_ref: (9C, L2) f32  im2col scratch (reused for both convs).
    x2_ref:  (C, Sp+2) f32 zero-padded conv1 output (conv2 input) scratch.
    """
    C = xq_ref.shape[1]
    xq = xq_ref[0]                                          # (C, Sp) f32
    offs = [(t // 3) * Wp + (t % 3) for t in range(9)]

    # ---- conv1: in-VMEM im2col -> single K=9C MXU dot -----------------------
    # conv1 is evaluated at padded-grid positions [Wp+1, Wp+1+L1); every tap
    # read stays inside [0, Sp) and non-image rows are zeroed by the mask.
    for t, off in enumerate(offs):
        rhs_ref[t * C:(t + 1) * C, :L1] = xq[:, off:off + L1]
    acc1 = jnp.dot(w1_ref[...], rhs_ref[:, :L1].astype(jnp.bfloat16),
                   preferred_element_type=jnp.float32)       # (C, L1)
    vals = jnp.maximum(acc1 + b1_ref[...], 0.0) * mask_ref[...]

    # ---- x2 = zero-padded conv1 output in flat padded-grid layout ----------
    tail = x2_ref.shape[1] - (Wp + 1 + L1)
    x2_ref[:, :Wp + 1] = jnp.zeros((C, Wp + 1), jnp.float32)
    x2_ref[:, Wp + 1 + L1:] = jnp.zeros((C, tail), jnp.float32)
    x2_ref[:, Wp + 1:Wp + 1 + L1] = vals

    # ---- conv2: same im2col trick, evaluated over all L2 output lanes ------
    for t, off in enumerate(offs):
        rhs_ref[t * C:(t + 1) * C, :] = x2_ref[:, off:off + L2]
    acc2 = jnp.dot(w2_ref[...], rhs_ref[...].astype(jnp.bfloat16),
                   preferred_element_type=jnp.float32)       # (C, L2)

    # fused epilogue: conv2 bias + global stream + identity residual
    # (identity is just another slice of the already-resident padded input).
    o_ref[0] = (acc2 + b2_ref[...] + glb_ref[0]
                + xq[:, Wp + 1:Wp + 1 + L2]).astype(o_ref.dtype)


def _freq_mlp_kernel(y_ref, w1_ref, w2_ref, o_ref):
    # y_ref: (1, 2C, tS); two 1x1 convs (channel matmuls) with ReLU between.
    y = y_ref[0].astype(jnp.bfloat16)
    h = jnp.maximum(jnp.dot(w1_ref[...], y,
                            preferred_element_type=jnp.float32), 0.0)
    o_ref[0] = jnp.dot(w2_ref[...], h.astype(jnp.bfloat16),
                       preferred_element_type=jnp.float32).astype(o_ref.dtype)


# ---------------------------------------------------------------------------
# pallas_call wrappers (layout plumbing only)
# ---------------------------------------------------------------------------
def fused_local_block(x, glb, c1_w, c1_b, c2_w, c2_b):
    """Fused FFTResBLock local stream + residual adds.  x, glb: (N, C, H, W)."""
    N, C, H, W = x.shape
    Hp, Wp = H + 2, W + 2
    Sp = Hp * Wp                 # flat padded-grid size
    L1 = H * Wp - 2              # conv1 evaluated lanes (guard-free range)
    L2 = H * Wp                  # conv2 evaluated lanes == output lane extent

    # single zero-pad + contiguous reshape -> flat padded-grid layout.
    xq = jnp.pad(x, ((0, 0), (0, 0), (1, 1), (1, 1))).reshape(N, C, Sp)

    # global-stream features re-strided to row pitch Wp (junk cols discarded later).
    glb_pf = jnp.pad(glb, ((0, 0), (0, 0), (0, 0), (0, Wp - W))).reshape(N, C, L2)

    # interior mask over conv1's evaluated range.
    jj = Wp + 1 + jnp.arange(L1)
    hh, ww = jj // Wp, jj % Wp
    mask = ((hh >= 1) & (hh <= H) & (ww >= 1) & (ww <= W))
    mask = mask.astype(jnp.float32)[None, :]

    # torch OIHW -> single (Cout, 9*Cin) tap-stacked bf16 matrices
    # (row o = [tap0: cin0..C-1 | tap1: ... | tap8: ...], tap = ky*3+kx).
    def tap_matrix(w):
        taps = jnp.transpose(w, (2, 3, 0, 1)).reshape(9, C, C)       # (tap, out, in)
        return taps.transpose(1, 0, 2).reshape(C, 9 * C).astype(jnp.bfloat16)

    w1, w2 = tap_matrix(c1_w), tap_matrix(c2_w)
    b1 = c1_b.reshape(C, 1).astype(jnp.float32)
    b2 = c2_b.reshape(C, 1).astype(jnp.float32)

    out = pl.pallas_call(
        functools.partial(_fused_local_kernel, Wp=Wp, L1=L1, L2=L2),
        out_shape=jax.ShapeDtypeStruct((N, C, L2), x.dtype),
        grid=(N,),
        in_specs=[
            pl.BlockSpec((1, C, Sp), lambda n: (n, 0, 0)),
            pl.BlockSpec((1, C, L2), lambda n: (n, 0, 0)),
            pl.BlockSpec((1, L1), lambda n: (0, 0)),
            pl.BlockSpec((C, 9 * C), lambda n: (0, 0)),
            pl.BlockSpec((C, 1), lambda n: (0, 0)),
            pl.BlockSpec((C, 9 * C), lambda n: (0, 0)),
            pl.BlockSpec((C, 1), lambda n: (0, 0)),
        ],
        out_specs=pl.BlockSpec((1, C, L2), lambda n: (n, 0, 0)),
        scratch_shapes=[
            pltpu.VMEM((9 * C, L2), jnp.float32),   # im2col workspace
            pltpu.VMEM((C, Sp + 2), jnp.float32),   # conv2 zero-padded input
        ],
        compiler_params=pltpu.CompilerParams(
            dimension_semantics=("parallel",)),
    )(xq, glb_pf, mask, w1, b1, w2, b2)

    # lane-dense flat layout -> (N, C, H, W): reshape + drop the 2 junk cols.
    return out.reshape(N, C, H, Wp)[..., :W]


def freq_mlp(yr, w1, w2):
    """conv1x1 -> ReLU -> conv1x1 (no bias) over the rfft2 grid.

    yr: (N, 2C, H, Wf) float32 with channels = [imag | real].
    w1, w2: (2C, 2C) torch Conv2d(2C, 2C, 1, bias=False) weights (out, in).
    """
    N, C2, H, Wf = yr.shape
    Sf = H * Wf
    # lane-dense spatial tiling padded to a tile multiple -> unmasked stores;
    # the 2Cx2C weights stay resident (constant index_map) across all tiles.
    tS = min(_round_up(Sf, 128), 8 * 1024)
    Sf_pad = _round_up(Sf, tS)
    gs = Sf_pad // tS
    y2 = jnp.pad(yr.reshape(N, C2, Sf), ((0, 0), (0, 0), (0, Sf_pad - Sf)))

    out = pl.pallas_call(
        _freq_mlp_kernel,
        out_shape=jax.ShapeDtypeStruct((N, C2, Sf_pad), jnp.float32),
        grid=(N, gs),
        in_specs=[
            pl.BlockSpec((1, C2, tS), lambda n, s: (n, 0, s)),
            pl.BlockSpec((C2, C2), lambda n, s: (0, 0)),
            pl.BlockSpec((C2, C2), lambda n, s: (0, 0)),
        ],
        out_specs=pl.BlockSpec((1, C2, tS), lambda n, s: (n, 0, s)),
        compiler_params=pltpu.CompilerParams(
            dimension_semantics=("parallel", "parallel")),
    )(y2, w1.astype(jnp.bfloat16), w2.astype(jnp.bfloat16))
    return out[:, :, :Sf].reshape(N, C2, H, Wf)


# ---------------------------------------------------------------------------
# FFTResBLock / DBlock forward (NCHW end to end)
# ---------------------------------------------------------------------------
def fft_res_block(x, p):
    N, C, H, W = x.shape
    # global stream: rfft2 -> cat([imag, real], ch) -> 1x1/ReLU/1x1 -> complex -> irfft2
    y = jnp.fft.rfft2(x, axes=(2, 3))
    yr = jnp.concatenate([jnp.imag(y), jnp.real(y)], axis=1).astype(jnp.float32)
    yr = freq_mlp(yr, p["g1_w"], p["g2_w"])
    y_real, y_imag = jnp.split(yr, 2, axis=1)            # torch.chunk -> (real, imag)
    glb = jnp.fft.irfft2(y_real + 1j * y_imag, s=(H, W), axes=(2, 3)).astype(x.dtype)
    # fused local stream + residual adds in a single pallas_call.
    return fused_local_block(x, glb, p["c1_w"], p["c1_b"], p["c2_w"], p["c2_b"])


def dblock_forward(x_nchw, params_list):
    x = x_nchw
    for p in params_list:
        x = fft_res_block(x, p)
    return x


# ---------------------------------------------------------------------------
# Deterministic parameter init (synthetic; matches torch module shapes)
# ---------------------------------------------------------------------------
def init_params(key, channel, num_res=2):
    params = []
    for i in range(num_res):
        ks = jax.random.split(jax.random.fold_in(key, i), 6)
        c = channel
        params.append(dict(
            c1_w=0.1 * jax.random.normal(ks[0], (c, c, 3, 3), jnp.float32),
            c1_b=0.1 * jax.random.normal(ks[1], (c,), jnp.float32),
            c2_w=0.1 * jax.random.normal(ks[2], (c, c, 3, 3), jnp.float32),
            c2_b=0.1 * jax.random.normal(ks[3], (c,), jnp.float32),
            g1_w=0.1 * jax.random.normal(ks[4], (2 * c, 2 * c), jnp.float32),
            g2_w=0.1 * jax.random.normal(ks[5], (2 * c, 2 * c), jnp.float32),
        ))
    return params


# ---------------------------------------------------------------------------
# Pure-JAX references.
#  matched=True  : same bf16-operand / f32-accumulate matmuls as the kernel
#                  (tight structural check of layout / tap indexing / residuals).
#  matched=False : full-f32 HIGHEST-precision reference (PyTorch-like numerics);
#                  compared with a looser tolerance to bound the bf16 truncation.
# ---------------------------------------------------------------------------
def _ref_block(x, p, matched):
    cast = (lambda a: a.astype(jnp.bfloat16)) if matched else (lambda a: a)
    prec = None if matched else jax.lax.Precision.HIGHEST

    def conv3x3(inp, w, b, relu):
        out = jax.lax.conv_general_dilated(
            cast(inp), cast(w), (1, 1), "SAME",
            dimension_numbers=("NCHW", "OIHW", "NCHW"),
            preferred_element_type=jnp.float32, precision=prec)
        out = out + b[None, :, None, None]
        return jnp.maximum(out, 0.0) if relu else out

    lcl = conv3x3(conv3x3(x, p["c1_w"], p["c1_b"], True),
                  p["c2_w"], p["c2_b"], False)

    N, C, H, W = x.shape
    y = jnp.fft.rfft2(x, axes=(2, 3))
    yr = jnp.concatenate([jnp.imag(y), jnp.real(y)], axis=1).astype(jnp.float32)
    h = jnp.maximum(jnp.einsum("oc,nchw->nohw", cast(p["g1_w"]), cast(yr),
                               preferred_element_type=jnp.float32,
                               precision=prec), 0.0)
    yr2 = jnp.einsum("oc,nchw->nohw", cast(p["g2_w"]), cast(h),
                     preferred_element_type=jnp.float32, precision=prec)
    y_real, y_imag = jnp.split(yr2, 2, axis=1)
    glb = jnp.fft.irfft2(y_real + 1j * y_imag, s=(H, W), axes=(2, 3)).astype(x.dtype)
    return lcl + glb + x


def ref_dblock(x, params_list, matched):
    for p in params_list:
        x = _ref_block(x, p, matched)
    return x


# ---------------------------------------------------------------------------
if __name__ == "__main__":
    key = jax.random.PRNGKey(0)
    kx, kp = jax.random.split(key)

    N, C, H, W = 2, 4, 16, 16
    x = jax.random.normal(kx, (N, C, H, W), jnp.float32)
    params = init_params(kp, C, num_res=2)

    out = jax.block_until_ready(jax.jit(dblock_forward)(x, params))
    assert out.shape == (N, C, H, W)

    # tight check vs. matched-precision (bf16-operand, f32-accum) reference
    ref_m = jax.block_until_ready(ref_dblock(x, params, matched=True))
    err_m = float(jnp.max(jnp.abs(out - ref_m)))
    assert jnp.allclose(out, ref_m, atol=2e-3, rtol=2e-3), err_m

    # loose check vs. full-f32 reference (bounds the bf16 MXU truncation)
    ref_f = jax.block_until_ready(ref_dblock(x, params, matched=False))
    err_f = float(jnp.max(jnp.abs(out - ref_f)))
    assert jnp.allclose(out, ref_f, atol=3e-2, rtol=3e-2), err_f

    print("KERNEL_OK")
</pallas_src>

<mosaic_0001>
module attributes {stable_mosaic.version = 11 : i64} {
  func.func @_freq_mlp_kernel(%arg0: i32, %arg1: i32, %arg2: memref<1x8x256xf32, #tpu.memory_space<vmem>>, %arg3: memref<8x8xbf16, #tpu.memory_space<vmem>>, %arg4: memref<8x8xbf16, #tpu.memory_space<vmem>>, %arg5: memref<1x8x256xf32, #tpu.memory_space<vmem>>) attributes {dimension_semantics = [#tpu.dimension_semantics<parallel>, #tpu.dimension_semantics<parallel>], iteration_bounds = array<i64: 2, 1>, scalar_prefetch = 0 : i64, scratch_operands = 0 : i64, tpu.core_type = #tpu.core_type<tc>, window_params = [{transform_indices = @transform_0, window_bounds = array<i64: 1, 8, 256>}, {pipeline_mode = #tpu.pipeline_mode<synchronous>, transform_indices = @transform_1, window_bounds = array<i64: 8, 8>}, {pipeline_mode = #tpu.pipeline_mode<synchronous>, transform_indices = @transform_2, window_bounds = array<i64: 8, 8>}, {transform_indices = @transform_3, window_bounds = array<i64: 1, 8, 256>}]} {
    %c0 = arith.constant 0 : index
    %c0_0 = arith.constant 0 : index
    %c0_1 = arith.constant 0 : index
    %0 = vector.load %arg2[%c0, %c0_0, %c0_1] : memref<1x8x256xf32, #tpu.memory_space<vmem>>, vector<1x8x256xf32>
    %1 = vector.shape_cast %0 : vector<1x8x256xf32> to vector<8x256xf32>
    %2 = arith.truncf %1 : vector<8x256xf32> to vector<8x256xbf16>
    %c0_2 = arith.constant 0 : index
    %c0_3 = arith.constant 0 : index
    %3 = vector.load %arg3[%c0_2, %c0_3] : memref<8x8xbf16, #tpu.memory_space<vmem>>, vector<8x8xbf16>
    %cst = arith.constant dense<0.000000e+00> : vector<8x256xf32>
    %4 = tpu.matmul %3, %2, %cst {dimension_numbers = #tpu.dot_dimension_numbers<[1], [0], [0], [1], [0, 0, 1, 1], [], []>} : vector<8x8xbf16>, vector<8x256xbf16>, vector<8x256xf32> -> vector<8x256xf32>
    %cst_4 = arith.constant 0.000000e+00 : f32
    %5 = vector.broadcast %cst_4 : f32 to vector<8x256xf32>
    %6 = arith.maximumf %4, %5 : vector<8x256xf32>
    %c0_5 = arith.constant 0 : index
    %c0_6 = arith.constant 0 : index
    %7 = vector.load %arg4[%c0_5, %c0_6] : memref<8x8xbf16, #tpu.memory_space<vmem>>, vector<8x8xbf16>
    %8 = arith.truncf %6 : vector<8x256xf32> to vector<8x256xbf16>
    %cst_7 = arith.constant dense<0.000000e+00> : vector<8x256xf32>
    %9 = tpu.matmul %7, %8, %cst_7 {dimension_numbers = #tpu.dot_dimension_numbers<[1], [0], [0], [1], [0, 0, 1, 1], [], []>} : vector<8x8xbf16>, vector<8x256xbf16>, vector<8x256xf32> -> vector<8x256xf32>
    %c0_8 = arith.constant 0 : index
    %c0_9 = arith.constant 0 : index
    %c0_10 = arith.constant 0 : index
    %10 = vector.load %arg5[%c0_8, %c0_9, %c0_10] : memref<1x8x256xf32, #tpu.memory_space<vmem>>, vector<1x8x256xf32>
    %11 = vector.shape_cast %10 : vector<1x8x256xf32> to vector<8x256xf32>
    %12 = vector.shape_cast %9 : vector<8x256xf32> to vector<1x8x256xf32>
    tpu.vector_store %arg5[%c0_8, %c0_9, %c0_10], %12 {strides = array<i32>} : memref<1x8x256xf32, #tpu.memory_space<vmem>>, vector<1x8x256xf32>,
    return
  }
  func.func @transform_0(%arg0: i32, %arg1: i32) -> (i32, i32, i32) {
    %c0_i32 = arith.constant 0 : i32
    %c0_i32_0 = arith.constant 0 : i32
    return %arg0, %c0_i32, %arg1 : i32, i32, i32
  }
  func.func @transform_1(%arg0: i32, %arg1: i32) -> (i32, i32) {
    %c0_i32 = arith.constant 0 : i32
    %c0_i32_0 = arith.constant 0 : i32
    %c0_i32_1 = arith.constant 0 : i32
    return %c0_i32, %c0_i32_0 : i32, i32
  }
  func.func @transform_2(%arg0: i32, %arg1: i32) -> (i32, i32) {
    %c0_i32 = arith.constant 0 : i32
    %c0_i32_0 = arith.constant 0 : i32
    %c0_i32_1 = arith.constant 0 : i32
    return %c0_i32, %c0_i32_0 : i32, i32
  }
  func.func @transform_3(%arg0: i32, %arg1: i32) -> (i32, i32, i32) {
    %c0_i32 = arith.constant 0 : i32
    %c0_i32_0 = arith.constant 0 : i32
    return %arg0, %c0_i32, %arg1 : i32, i32, i32
  }
}

module attributes {stable_mosaic.version = 11 : i64} {
  func.func @_fused_local_kernel(%arg0: i32, %arg1: memref<1x4x324xf32, #tpu.memory_space<vmem>>, %arg2: memref<1x4x288xf32, #tpu.memory_space<vmem>>, %arg3: memref<1x286xf32, #tpu.memory_space<vmem>>, %arg4: memref<4x36xbf16, #tpu.memory_space<vmem>>, %arg5: memref<4x1xf32, #tpu.memory_space<vmem>>, %arg6: memref<4x36xbf16, #tpu.memory_space<vmem>>, %arg7: memref<4x1xf32, #tpu.memory_space<vmem>>, %arg8: memref<1x4x288xf32, #tpu.memory_space<vmem>>, %arg9: memref<36x288xf32, #tpu.memory_space<vmem>>, %arg10: memref<4x326xf32, #tpu.memory_space<vmem>>) attributes {dimension_semantics = [#tpu.dimension_semantics<parallel>], iteration_bounds = array<i64: 2>, scalar_prefetch = 0 : i64, scratch_operands = 2 : i64, tpu.core_type = #tpu.core_type<tc>, window_params = [{transform_indices = @transform_0, window_bounds = array<i64: 1, 4, 324>}, {transform_indices = @transform_1, window_bounds = array<i64: 1, 4, 288>}, {pipeline_mode = #tpu.pipeline_mode<synchronous>, transform_indices = @transform_2, window_bounds = array<i64: 1, 286>}, {pipeline_mode = #tpu.pipeline_mode<synchronous>, transform_indices = @transform_3, window_bounds = array<i64: 4, 36>}, {pipeline_mode = #tpu.pipeline_mode<synchronous>, transform_indices = @transform_4, window_bounds = array<i64: 4, 1>}, {pipeline_mode = #tpu.pipeline_mode<synchronous>, transform_indices = @transform_5, window_bounds = array<i64: 4, 36>}, {pipeline_mode = #tpu.pipeline_mode<synchronous>, transform_indices = @transform_6, window_bounds = array<i64: 4, 1>}, {transform_indices = @transform_7, window_bounds = array<i64: 1, 4, 288>}]} {
    %c0 = arith.constant 0 : index
    %c0_0 = arith.constant 0 : index
    %c0_1 = arith.constant 0 : index
    %0 = vector.load %arg1[%c0, %c0_0, %c0_1] : memref<1x4x324xf32, #tpu.memory_space<vmem>>, vector<1x4x324xf32>
    %1 = vector.shape_cast %0 : vector<1x4x324xf32> to vector<4x324xf32>
    %2 = vector.extract_strided_slice %1 {offsets = [0, 0], sizes = [4, 286], strides = [1, 1]} : vector<4x324xf32> to vector<4x286xf32>
    %c0_2 = arith.constant 0 : index
    %c0_3 = arith.constant 0 : index
    %3 = vector.load %arg9[%c0_2, %c0_3] : memref<36x288xf32, #tpu.memory_space<vmem>>, vector<4x286xf32>
    tpu.vector_store %arg9[%c0_2, %c0_3], %2 {strides = array<i32>} : memref<36x288xf32, #tpu.memory_space<vmem>>, vector<4x286xf32>,
    %4 = vector.extract_strided_slice %1 {offsets = [0, 1], sizes = [4, 286], strides = [1, 1]} : vector<4x324xf32> to vector<4x286xf32>
    %c4 = arith.constant 4 : index
    %c0_4 = arith.constant 0 : index
    %5 = vector.load %arg9[%c4, %c0_4] : memref<36x288xf32, #tpu.memory_space<vmem>>, vector<4x286xf32>
    tpu.vector_store %arg9[%c4, %c0_4], %4 {strides = array<i32>} : memref<36x288xf32, #tpu.memory_space<vmem>>, vector<4x286xf32>,
    %6 = vector.extract_strided_slice %1 {offsets = [0, 2], sizes = [4, 286], strides = [1, 1]} : vector<4x324xf32> to vector<4x286xf32>
    %c8 = arith.constant 8 : index
    %c0_5 = arith.constant 0 : index
    %7 = vector.load %arg9[%c8, %c0_5] : memref<36x288xf32, #tpu.memory_space<vmem>>, vector<4x286xf32>
    tpu.vector_store %arg9[%c8, %c0_5], %6 {strides = array<i32>} : memref<36x288xf32, #tpu.memory_space<vmem>>, vector<4x286xf32>,
    %8 = vector.extract_strided_slice %1 {offsets = [0, 18], sizes = [4, 286], strides = [1, 1]} : vector<4x324xf32> to vector<4x286xf32>
    %c12 = arith.constant 12 : index
    %c0_6 = arith.constant 0 : index
    %9 = vector.load %arg9[%c12, %c0_6] : memref<36x288xf32, #tpu.memory_space<vmem>>, vector<4x286xf32>
    tpu.vector_store %arg9[%c12, %c0_6], %8 {strides = array<i32>} : memref<36x288xf32, #tpu.memory_space<vmem>>, vector<4x286xf32>,
    %10 = vector.extract_strided_slice %1 {offsets = [0, 19], sizes = [4, 286], strides = [1, 1]} : vector<4x324xf32> to vector<4x286xf32>
    %c16 = arith.constant 16 : index
    %c0_7 = arith.constant 0 : index
    %11 = vector.load %arg9[%c16, %c0_7] : memref<36x288xf32, #tpu.memory_space<vmem>>, vector<4x286xf32>
    tpu.vector_store %arg9[%c16, %c0_7], %10 {strides = array<i32>} : memref<36x288xf32, #tpu.memory_space<vmem>>, vector<4x286xf32>,
    %12 = vector.extract_strided_slice %1 {offsets = [0, 20], sizes = [4, 286], strides = [1, 1]} : vector<4x324xf32> to vector<4x286xf32>
    %c20 = arith.constant 20 : index
    %c0_8 = arith.constant 0 : index
    %13 = vector.load %arg9[%c20, %c0_8] : memref<36x288xf32, #tpu.memory_space<vmem>>, vector<4x286xf32>
    tpu.vector_store %arg9[%c20, %c0_8], %12 {strides = array<i32>} : memref<36x288xf32, #tpu.memory_space<vmem>>, vector<4x286xf32>,
    %14 = vector.extract_strided_slice %1 {offsets = [0, 36], sizes = [4, 286], strides = [1, 1]} : vector<4x324xf32> to vector<4x286xf32>
    %c24 = arith.constant 24 : index
    %c0_9 = arith.constant 0 : index
    %15 = vector.load %arg9[%c24, %c0_9] : memref<36x288xf32, #tpu.memory_space<vmem>>, vector<4x286xf32>
    tpu.vector_store %arg9[%c24, %c0_9], %14 {strides = array<i32>} : memref<36x288xf32, #tpu.memory_space<vmem>>, vector<4x286xf32>,
    %16 = vector.extract_strided_slice %1 {offsets = [0, 37], sizes = [4, 286], strides = [1, 1]} : vector<4x324xf32> to vector<4x286xf32>
    %c28 = arith.constant 28 : index
    %c0_10 = arith.constant 0 : index
    %17 = vector.load %arg9[%c28, %c0_10] : memref<36x288xf32, #tpu.memory_space<vmem>>, vector<4x286xf32>
    tpu.vector_store %arg9[%c28, %c0_10], %16 {strides = array<i32>} : memref<36x288xf32, #tpu.memory_space<vmem>>, vector<4x286xf32>,
    %18 = vector.extract_strided_slice %1 {offsets = [0, 38], sizes = [4, 286], strides = [1, 1]} : vector<4x324xf32> to vector<4x286xf32>
    %c32 = arith.constant 32 : index
    %c0_11 = arith.constant 0 : index
    %19 = vector.load %arg9[%c32, %c0_11] : memref<36x288xf32, #tpu.memory_space<vmem>>, vector<4x286xf32>
    tpu.vector_store %arg9[%c32, %c0_11], %18 {strides = array<i32>} : memref<36x288xf32, #tpu.memory_space<vmem>>, vector<4x286xf32>,
    %c0_12 = arith.constant 0 : index
    %c0_13 = arith.constant 0 : index
    %20 = vector.load %arg4[%c0_12, %c0_13] : memref<4x36xbf16, #tpu.memory_space<vmem>>, vector<4x36xbf16>
    %c0_14 = arith.constant 0 : index
    %c0_15 = arith.constant 0 : index
    %21 = vector.load %arg9[%c0_14, %c0_15] : memref<36x288xf32, #tpu.memory_space<vmem>>, vector<36x286xf32>
    %22 = arith.truncf %21 : vector<36x286xf32> to vector<36x286xbf16>
    %cst = arith.constant dense<0.000000e+00> : vector<4x286xf32>
    %23 = tpu.matmul %20, %22, %cst {dimension_numbers = #tpu.dot_dimension_numbers<[1], [0], [0], [1], [0, 0, 1, 1], [], []>} : vector<4x36xbf16>, vector<36x286xbf16>, vector<4x286xf32> -> vector<4x286xf32>
    %c0_16 = arith.constant 0 : index
    %c0_17 = arith.constant 0 : index
    %24 = vector.load %arg5[%c0_16, %c0_17] : memref<4x1xf32, #tpu.memory_space<vmem>>, vector<4x1xf32>
    %25 = vector.broadcast %24 : vector<4x1xf32> to vector<4x286xf32>
    %26 = arith.addf %23, %25 : vector<4x286xf32>
    %cst_18 = arith.constant 0.000000e+00 : f32
    %27 = vector.broadcast %cst_18 : f32 to vector<4x286xf32>
    %28 = arith.maximumf %26, %27 : vector<4x286xf32>
    %c0_19 = arith.constant 0 : index
    %c0_20 = arith.constant 0 : index
    %29 = vector.load %arg3[%c0_19, %c0_20] : memref<1x286xf32, #tpu.memory_space<vmem>>, vector<1x286xf32>
    %30 = vector.broadcast %29 : vector<1x286xf32> to vector<4x286xf32>
    %31 = arith.mulf %28, %30 : vector<4x286xf32>
    %cst_21 = arith.constant 0.000000e+00 : f32
    %32 = vector.broadcast %cst_21 : f32 to vector<4x19xf32>
    %c0_22 = arith.constant 0 : index
    %c0_23 = arith.constant 0 : index
    %33 = vector.load %arg10[%c0_22, %c0_23] : memref<4x326xf32, #tpu.memory_space<vmem>>, vector<4x19xf32>
    tpu.vector_store %arg10[%c0_22, %c0_23], %32 {strides = array<i32>} : memref<4x326xf32, #tpu.memory_space<vmem>>, vector<4x19xf32>,
    %cst_24 = arith.constant 0.000000e+00 : f32
    %34 = vector.broadcast %cst_24 : f32 to vector<4x21xf32>
    %c0_25 = arith.constant 0 : index
    %c305 = arith.constant 305 : index
    %35 = vector.load %arg10[%c0_25, %c305] : memref<4x326xf32, #tpu.memory_space<vmem>>, vector<4x21xf32>
    tpu.vector_store %arg10[%c0_25, %c305], %34 {strides = array<i32>} : memref<4x326xf32, #tpu.memory_space<vmem>>, vector<4x21xf32>,
    %c0_26 = arith.constant 0 : index
    %c19 = arith.constant 19 : index
    %36 = vector.load %arg10[%c0_26, %c19] : memref<4x326xf32, #tpu.memory_space<vmem>>, vector<4x286xf32>
    tpu.vector_store %arg10[%c0_26, %c19], %31 {strides = array<i32>} : memref<4x326xf32, #tpu.memory_space<vmem>>, vector<4x286xf32>,
    %c0_27 = arith.constant 0 : index
    %c0_28 = arith.constant 0 : index
    %37 = vector.load %arg10[%c0_27, %c0_28] : memref<4x326xf32, #tpu.memory_space<vmem>>, vector<4x288xf32>
    %c0_29 = arith.constant 0 : index
    %c0_30 = arith.constant 0 : index
    %38 = vector.load %arg9[%c0_29, %c0_30] : memref<36x288xf32, #tpu.memory_space<vmem>>, vector<4x288xf32>
    tpu.vector_store %arg9[%c0_29, %c0_30], %37 {strides = array<i32>} : memref<36x288xf32, #tpu.memory_space<vmem>>, vector<4x288xf32>,
    %c0_31 = arith.constant 0 : index
    %c1 = arith.constant 1 : index
    %39 = vector.load %arg10[%c0_31, %c1] : memref<4x326xf32, #tpu.memory_space<vmem>>, vector<4x288xf32>
    %c4_32 = arith.constant 4 : index
    %c0_33 = arith.constant 0 : index
    %40 = vector.load %arg9[%c4_32, %c0_33] : memref<36x288xf32, #tpu.memory_space<vmem>>, vector<4x288xf32>
    tpu.vector_store %arg9[%c4_32, %c0_33], %39 {strides = array<i32>} : memref<36x288xf32, #tpu.memory_space<vmem>>, vector<4x288xf32>,
    %c0_34 = arith.constant 0 : index
    %c2 = arith.constant 2 : index
    %41 = vector.load %arg10[%c0_34, %c2] : memref<4x326xf32, #tpu.memory_space<vmem>>, vector<4x288xf32>
    %c8_35 = arith.constant 8 : index
    %c0_36 = arith.constant 0 : index
    %42 = vector.load %arg9[%c8_35, %c0_36] : memref<36x288xf32, #tpu.memory_space<vmem>>, vector<4x288xf32>
    tpu.vector_store %arg9[%c8_35, %c0_36], %41 {strides = array<i32>} : memref<36x288xf32, #tpu.memory_space<vmem>>, vector<4x288xf32>,
    %c0_37 = arith.constant 0 : index
    %c18 = arith.constant 18 : index
    %43 = vector.load %arg10[%c0_37, %c18] : memref<4x326xf32, #tpu.memory_space<vmem>>, vector<4x288xf32>
    %c12_38 = arith.constant 12 : index
    %c0_39 = arith.constant 0 : index
    %44 = vector.load %arg9[%c12_38, %c0_39] : memref<36x288xf32, #tpu.memory_space<vmem>>, vector<4x288xf32>
    tpu.vector_store %arg9[%c12_38, %c0_39], %43 {strides = array<i32>} : memref<36x288xf32, #tpu.memory_space<vmem>>, vector<4x288xf32>,
    %c0_40 = arith.constant 0 : index
    %c19_41 = arith.constant 19 : index
    %45 = vector.load %arg10[%c0_40, %c19_41] : memref<4x326xf32, #tpu.memory_space<vmem>>, vector<4x288xf32>
    %c16_42 = arith.constant 16 : index
    %c0_43 = arith.constant 0 : index
    %46 = vector.load %arg9[%c16_42, %c0_43] : memref<36x288xf32, #tpu.memory_space<vmem>>, vector<4x288xf32>
    tpu.vector_store %arg9[%c16_42, %c0_43], %45 {strides = array<i32>} : memref<36x288xf32, #tpu.memory_space<vmem>>, vector<4x288xf32>,
    %c0_44 = arith.constant 0 : index
    %c20_45 = arith.constant 20 : index
    %47 = vector.load %arg10[%c0_44, %c20_45] : memref<4x326xf32, #tpu.memory_space<vmem>>, vector<4x288xf32>
    %c20_46 = arith.constant 20 : index
    %c0_47 = arith.constant 0 : index
    %48 = vector.load %arg9[%c20_46, %c0_47] : memref<36x288xf32, #tpu.memory_space<vmem>>, vector<4x288xf32>
    tpu.vector_store %arg9[%c20_46, %c0_47], %47 {strides = array<i32>} : memref<36x288xf32, #tpu.memory_space<vmem>>, vector<4x288xf32>,
    %c0_48 = arith.constant 0 : index
    %c36 = arith.constant 36 : index
    %49 = vector.load %arg10[%c0_48, %c36] : memref<4x326xf32, #tpu.memory_space<vmem>>, vector<4x288xf32>
    %c24_49 = arith.constant 24 : index
    %c0_50 = arith.constant 0 : index
    %50 = vector.load %arg9[%c24_49, %c0_50] : memref<36x288xf32, #tpu.memory_space<vmem>>, vector<4x288xf32>
    tpu.vector_store %arg9[%c24_49, %c0_50], %49 {strides = array<i32>} : memref<36x288xf32, #tpu.memory_space<vmem>>, vector<4x288xf32>,
    %c0_51 = arith.constant 0 : index
    %c37 = arith.constant 37 : index
    %51 = vector.load %arg10[%c0_51, %c37] : memref<4x326xf32, #tpu.memory_space<vmem>>, vector<4x288xf32>
    %c28_52 = arith.constant 28 : index
    %c0_53 = arith.constant 0 : index
    %52 = vector.load %arg9[%c28_52, %c0_53] : memref<36x288xf32, #tpu.memory_space<vmem>>, vector<4x288xf32>
    tpu.vector_store %arg9[%c28_52, %c0_53], %51 {strides = array<i32>} : memref<36x288xf32, #tpu.memory_space<vmem>>, vector<4x288xf32>,
    %c0_54 = arith.constant 0 : index
    %c38 = arith.constant 38 : index
    %53 = vector.load %arg10[%c0_54, %c38] : memref<4x326xf32, #tpu.memory_space<vmem>>, vector<4x288xf32>
    %c32_55 = arith.constant 32 : index
    %c0_56 = arith.constant 0 : index
    %54 = vector.load %arg9[%c32_55, %c0_56] : memref<36x288xf32, #tpu.memory_space<vmem>>, vector<4x288xf32>
    tpu.vector_store %arg9[%c32_55, %c0_56], %53 {strides = array<i32>} : memref<36x288xf32, #tpu.memory_space<vmem>>, vector<4x288xf32>,
    %c0_57 = arith.constant 0 : index
    %c0_58 = arith.constant 0 : index
    %55 = vector.load %arg6[%c0_57, %c0_58] : memref<4x36xbf16, #tpu.memory_space<vmem>>, vector<4x36xbf16>
    %c0_59 = arith.constant 0 : index
    %c0_60 = arith.constant 0 : index
    %56 = vector.load %arg9[%c0_59, %c0_60] : memref<36x288xf32, #tpu.memory_space<vmem>>, vector<36x288xf32>
    %57 = arith.truncf %56 : vector<36x288xf32> to vector<36x288xbf16>
    %cst_61 = arith.constant dense<0.000000e+00> : vector<4x288xf32>
    %58 = tpu.matmul %55, %57, %cst_61 {dimension_numbers = #tpu.dot_dimension_numbers<[1], [0], [0], [1], [0, 0, 1, 1], [], []>} : vector<4x36xbf16>, vector<36x288xbf16>, vector<4x288xf32> -> vector<4x288xf32>
    %c0_62 = arith.constant 0 : index
    %c0_63 = arith.constant 0 : index
    %59 = vector.load %arg7[%c0_62, %c0_63] : memref<4x1xf32, #tpu.memory_space<vmem>>, vector<4x1xf32>
    %60 = vector.broadcast %59 : vector<4x1xf32> to vector<4x288xf32>
    %61 = arith.addf %58, %60 : vector<4x288xf32>
    %c0_64 = arith.constant 0 : index
    %c0_65 = arith.constant 0 : index
    %c0_66 = arith.constant 0 : index
    %62 = vector.load %arg2[%c0_64, %c0_65, %c0_66] : memref<1x4x288xf32, #tpu.memory_space<vmem>>, vector<1x4x288xf32>
    %63 = vector.shape_cast %62 : vector<1x4x288xf32> to vector<4x288xf32>
    %64 = arith.addf %61, %63 : vector<4x288xf32>
    %65 = vector.extract_strided_slice %1 {offsets = [0, 19], sizes = [4, 288], strides = [1, 1]} : vector<4x324xf32> to vector<4x288xf32>
    %66 = arith.addf %64, %65 : vector<4x288xf32>
    %c0_67 = arith.constant 0 : index
    %c0_68 = arith.constant 0 : index
    %c0_69 = arith.constant 0 : index
    %67 = vector.load %arg8[%c0_67, %c0_68, %c0_69] : memref<1x4x288xf32, #tpu.memory_space<vmem>>, vector<1x4x288xf32>
    %68 = vector.shape_cast %67 : vector<1x4x288xf32> to vector<4x288xf32>
    %69 = vector.shape_cast %66 : vector<4x288xf32> to vector<1x4x288xf32>
    tpu.vector_store %arg8[%c0_67, %c0_68, %c0_69], %69 {strides = array<i32>} : memref<1x4x288xf32, #tpu.memory_space<vmem>>, vector<1x4x288xf32>,
    return
  }
  func.func @transform_0(%arg0: i32) -> (i32, i32, i32) {
    %c0_i32 = arith.constant 0 : i32
    %c0_i32_0 = arith.constant 0 : i32
    %c0_i32_1 = arith.constant 0 : i32
    return %arg0, %c0_i32, %c0_i32_0 : i32, i32, i32
  }
  func.func @transform_1(%arg0: i32) -> (i32, i32, i32) {
    %c0_i32 = arith.constant 0 : i32
    %c0_i32_0 = arith.constant 0 : i32
    %c0_i32_1 = arith.constant 0 : i32
    return %arg0, %c0_i32, %c0_i32_0 : i32, i32, i32
  }
  func.func @transform_2(%arg0: i32) -> (i32, i32) {
    %c0_i32 = arith.constant 0 : i32
    %c0_i32_0 = arith.constant 0 : i32
    %c0_i32_1 = arith.constant 0 : i32
    return %c0_i32, %c0_i32_0 : i32, i32
  }
  func.func @transform_3(%arg0: i32) -> (i32, i32) {
    %c0_i32 = arith.constant 0 : i32
    %c0_i32_0 = arith.constant 0 : i32
    %c0_i32_1 = arith.constant 0 : i32
    return %c0_i32, %c0_i32_0 : i32, i32
  }
  func.func @transform_4(%arg0: i32) -> (i32, i32) {
    %c0_i32 = arith.constant 0 : i32
    %c0_i32_0 = arith.constant 0 : i32
    %c0_i32_1 = arith.constant 0 : i32
    return %c0_i32, %c0_i32_0 : i32, i32
  }
  func.func @transform_5(%arg0: i32) -> (i32, i32) {
    %c0_i32 = arith.constant 0 : i32
    %c0_i32_0 = arith.constant 0 : i32
    %c0_i32_1 = arith.constant 0 : i32
    return %c0_i32, %c0_i32_0 : i32, i32
  }
  func.func @transform_6(%arg0: i32) -> (i32, i32) {
    %c0_i32 = arith.constant 0 : i32
    %c0_i32_0 = arith.constant 0 : i32
    %c0_i32_1 = arith.constant 0 : i32
    return %c0_i32, %c0_i32_0 : i32, i32
  }
  func.func @transform_7(%arg0: i32) -> (i32, i32, i32) {
    %c0_i32 = arith.constant 0 : i32
    %c0_i32_0 = arith.constant 0 : i32
    %c0_i32_1 = arith.constant 0 : i32
    return %arg0, %c0_i32, %c0_i32_0 : i32, i32, i32
  }
}

</mosaic_0001>

<llo_original>
// kernel: reverse.5
$region0: #{reverse.5}
  %s0 = inlined_call_operand.vmem [shape: f32[2,4,16,7], index: 0, kind: input, shape index: {}]
  %s1 = inlined_call_operand.vmem [shape: f32[2,4,16,7], index: 1, kind: output, shape index: {}]
  $region1: #{reverse.5} parent=0
    #allocation0 [shape = 'u8[65536]{0}', space=vmem, size = 0x10000, scoped, tag = 'operand span for operand 0']
    #allocation1 [shape = 'u8[32768]{0}', space=vmem, size = 0x8000, scoped, tag = 'operand span for operand 1']
    %s2 = scalar_lea.vmem [#allocation0], 8
    // Predicated region
    $region2: #{reverse.5} parent=1 // pred_check
      _
    $region3: #{reverse.5} parent=1 // pred_check_branch
      %4 = sbr.rel (0) target = $region5
    $region4: #{reverse.5} parent=1 // pred_region
      // Predicated region
      $region6: #{reverse.5} parent=4 // pred_check
        _
      $region7: #{reverse.5} parent=4 // pred_check_branch
        %6 = sbr.rel (0) target = $region9
      $region8: #{reverse.5} parent=4 // pred_region
        // Predicated region
        $region21: #{reverse.5} parent=8 // pred_check
          _
        $region22: #{reverse.5} parent=8 // pred_check_branch
          %35 = sbr.rel (0) target = $region24
        $region23: #{reverse.5} parent=8 // pred_region
          loop: start=0, step=1, limit=1
          $region25: #{reverse.5} parent=23 // loop_pre_header
            _
          $region26: #{reverse.5} parent=23 // loop_header
            %s37 = sphi 0, %s41
            %p38 = scmp.ge.s32.totalorder %s37, 1
            %s42 = sphi %s0, %s0
            %s43 = sphi %s2, %s2
          $region27: #{reverse.5} parent=23 // loop_header_branch
            %40 = sbr.rel (%p38) target = $region31
          $region28: #{reverse.5} parent=23 // loop_body
            %v44 = vld [vmem:[%s42] sm:$0xff]
            %45 = vst [vmem:[%s43] sm:$0xff] %v44
            %v46 = vld [vmem:[%s42 + $0x8] sm:$0xff]
            %47 = vst [vmem:[%s43 + $0x10] sm:$0xff] %v46
            %v48 = vld [vmem:[%s42 + $0x10] sm:$0xff]
            %49 = vst [vmem:[%s43 + $0x20] sm:$0xff] %v48
            %v50 = vld [vmem:[%s42 + $0x18] sm:$0xff]
            %51 = vst [vmem:[%s43 + $0x30] sm:$0xff] %v50
            %v52 = vld [vmem:[%s42 + $0x20] sm:$0xff]
            %53 = vst [vmem:[%s43 + $0x40] sm:$0xff] %v52
            %v54 = vld [vmem:[%s42 + $0x28] sm:$0xff]
            %55 = vst [vmem:[%s43 + $0x50] sm:$0xff] %v54
            %v56 = vld [vmem:[%s42 + $0x30] sm:$0xff]
            %57 = vst [vmem:[%s43 + $0x60] sm:$0xff] %v56
            %v58 = vld [vmem:[%s42 + $0x38] sm:$0xff]
            %59 = vst [vmem:[%s43 + $0x70] sm:$0xff] %v58
          $region29: #{reverse.5} parent=23 // loop_footer
            %s41 = sadd.s32 1, %s37
          $region30: #{reverse.5} parent=23 // loop_footer_branch
            %36 = sbr.rel target = $region26
          $region31: #{reverse.5} parent=23 // loop_exit
            _
        $region24: #{reverse.5} parent=8 // pred_fallthru
          _
        // Predicated region
        $region32: #{reverse.5} parent=8 // pred_check
          _
        $region33: #{reverse.5} parent=8 // pred_check_branch
          %61 = sbr.rel target = $region35
        $region34: #{reverse.5} parent=8 // pred_region
          _
        $region35: #{reverse.5} parent=8 // pred_fallthru
          _
      $region9: #{reverse.5} parent=4 // pred_fallthru
        _
      // Predicated region
      $region10: #{reverse.5} parent=4 // pred_check
        _
      $region11: #{reverse.5} parent=4 // pred_check_branch
        %8 = sbr.rel target = $region13
      $region12: #{reverse.5} parent=4 // pred_region
        loop: start=0, step=1, limit=1
        $region14: #{reverse.5} parent=12 // loop_pre_header
          _
        $region15: #{reverse.5} parent=12 // loop_header
          %s11 = sphi 0, %s15
          %p12 = scmp.ge.s32.totalorder %s11, 1
          %s16 = sphi %s0, %s0
          %s17 = sphi %s2, %s2
        $region16: #{reverse.5} parent=12 // loop_header_branch
          %14 = sbr.rel (%p12) target = $region20
        $region17: #{reverse.5} parent=12 // loop_body
          %v18 = vld [vmem:[%s16] sm:$0xff]
          %19 = vst [vmem:[%s17] sm:$0xff] %v18
          %v20 = vld [vmem:[%s16 + $0x8] sm:$0xff]
          %21 = vst [vmem:[%s17 + $0x10] sm:$0xff] %v20
          %v22 = vld [vmem:[%s16 + $0x10] sm:$0xff]
          %23 = vst [vmem:[%s17 + $0x20] sm:$0xff] %v22
          %v24 = vld [vmem:[%s16 + $0x18] sm:$0xff]
          %25 = vst [vmem:[%s17 + $0x30] sm:$0xff] %v24
          %v26 = vld [vmem:[%s16 + $0x20] sm:$0xff]
          %27 = vst [vmem:[%s17 + $0x40] sm:$0xff] %v26
          %v28 = vld [vmem:[%s16 + $0x28] sm:$0xff]
          %29 = vst [vmem:[%s17 + $0x50] sm:$0xff] %v28
          %v30 = vld [vmem:[%s16 + $0x30] sm:$0xff]
          %31 = vst [vmem:[%s17 + $0x60] sm:$0xff] %v30
          %v32 = vld [vmem:[%s16 + $0x38] sm:$0xff]
          %33 = vst [vmem:[%s17 + $0x70] sm:$0xff] %v32
        $region18: #{reverse.5} parent=12 // loop_footer
          %s15 = sadd.s32 1, %s11
        $region19: #{reverse.5} parent=12 // loop_footer_branch
          %10 = sbr.rel target = $region15
        $region20: #{reverse.5} parent=12 // loop_exit
          _
      $region13: #{reverse.5} parent=4 // pred_fallthru
        _
    $region5: #{reverse.5} parent=1 // pred_fallthru
      _
    %62 = vnop
    %s63 = scalar_lea.vmem [#allocation0], 7
    %v64 = vld [vmem:[%s63] ss:$-1 sm:$0xff]
    %v65 = vrot.slane %v64, 1
    %66 = vst [vmem:[#allocation1] sm:$0xff] %v65
    %s67 = scalar_lea.vmem [#allocation0], 8
    %s68 = scalar_lea.vmem %s67, 7 [#allocation0]
    %v69 = vld [vmem:[%s68] ss:$-1 sm:$0xff]
    %v70 = vrot.slane %v69, 1
    %v71 = vlaneseq
    %v72 = vshrl.u32 %v71, 7
    %vm73 = vcmp.lt.s32.totalorder %v72, 7
    %74 = vst.msk [vmem:[#allocation1] sm:$0xff] %vm73, %v70
    %s75 = scalar_lea.vmem [#allocation1], 8
    %s76 = scalar_lea.vmem [#allocation0], 16
    %s77 = scalar_lea.vmem %s76, 7 [#allocation0]
    %v78 = vld [vmem:[%s77] ss:$-1 sm:$0xff]
    %v79 = vrot.slane %v78, 1
    %80 = vst [vmem:[%s75] sm:$0xff] %v79
    %s81 = scalar_lea.vmem %s76, 8 [#allocation0]
    %s82 = scalar_lea.vmem %s81, 7 [#allocation0]
    %v83 = vld [vmem:[%s82] ss:$-1 sm:$0xff]
    %v84 = vrot.slane %v83, 1
    %v85 = vlaneseq
    %v86 = vshrl.u32 %v85, 7
    %vm87 = vcmp.lt.s32.totalorder %v86, 7
    %88 = vst.msk [vmem:[%s75] sm:$0xff] %vm87, %v84
    %s89 = scalar_lea.vmem [#allocation1], 16
    %s90 = scalar_lea.vmem [#allocation0], 32
    %s91 = scalar_lea.vmem %s90, 7 [#allocation0]
    %v92 = vld [vmem:[%s91] ss:$-1 sm:$0xff]
    %v93 = vrot.slane %v92, 1
    %94 = vst [vmem:[%s89] sm:$0xff] %v93
    %s95 = scalar_lea.vmem %s90, 8 [#allocation0]
    %s96 = scalar_lea.vmem %s95, 7 [#allocation0]
    %v97 = vld [vmem:[%s96] ss:$-1 sm:$0xff]
    %v98 = vrot.slane %v97, 1
    %v99 = vlaneseq
    %v100 = vshrl.u32 %v99, 7
    %vm101 = vcmp.lt.s32.totalorder %v100, 7
    %102 = vst.msk [vmem:[%s89] sm:$0xff] %vm101, %v98
    %s103 = scalar_lea.vmem [#allocation1], 24
    %s104 = scalar_lea.vmem [#allocation0], 48
    %s105 = scalar_lea.vmem %s104, 7 [#allocation0]
    %v106 = vld [vmem:[%s105] ss:$-1 sm:$0xff]
    %v107 = vrot.slane %v106, 1
    %108 = vst [vmem:[%s103] sm:$0xff] %v107
    %s109 = scalar_lea.vmem %s104, 8 [#allocation0]
    %s110 = scalar_lea.vmem %s109, 7 [#allocation0]
    %v111 = vld [vmem:[%s110] ss:$-1 sm:$0xff]
    %v112 = vrot.slane %v111, 1
    %v113 = vlaneseq
    %v114 = vshrl.u32 %v113, 7
    %vm115 = vcmp.lt.s32.totalorder %v114, 7
    %116 = vst.msk [vmem:[%s103] sm:$0xff] %vm115, %v112
    %s117 = scalar_lea.vmem [#allocation1], 32
    %s118 = scalar_lea.vmem [#allocation0], 64
    %s119 = scalar_lea.vmem %s118, 7 [#allocation0]
    %v120 = vld [vmem:[%s119] ss:$-1 sm:$0xff]
    %v121 = vrot.slane %v120, 1
    %122 = vst [vmem:[%s117] sm:$0xff] %v121
    %s123 = scalar_lea.vmem %s118, 8 [#allocation0]
    %s124 = scalar_lea.vmem %s123, 7 [#allocation0]
    %v125 = vld [vmem:[%s124] ss:$-1 sm:$0xff]
    %v126 = vrot.slane %v125, 1
    %v127 = vlaneseq
    %v128 = vshrl.u32 %v127, 7
    %vm129 = vcmp.lt.s32.totalorder %v128, 7
    %130 = vst.msk [vmem:[%s117] sm:$0xff] %vm129, %v126
    %s131 = scalar_lea.vmem [#allocation1], 40
    %s132 = scalar_lea.vmem [#allocation0], 80
    %s133 = scalar_lea.vmem %s132, 7 [#allocation0]
    %v134 = vld [vmem:[%s133] ss:$-1 sm:$0xff]
    %v135 = vrot.slane %v134, 1
    %136 = vst [vmem:[%s131] sm:$0xff] %v135
    %s137 = scalar_lea.vmem %s132, 8 [#allocation0]
    %s138 = scalar_lea.vmem %s137, 7 [#allocation0]
    %v139 = vld [vmem:[%s138] ss:$-1 sm:$0xff]
    %v140 = vrot.slane %v139, 1
    %v141 = vlaneseq
    %v142 = vshrl.u32 %v141, 7
    %vm143 = vcmp.lt.s32.totalorder %v142, 7
    %144 = vst.msk [vmem:[%s131] sm:$0xff] %vm143, %v140
    %s145 = scalar_lea.vmem [#allocation1], 48
    %s146 = scalar_lea.vmem [#allocation0], 96
    %s147 = scalar_lea.vmem %s146, 7 [#allocation0]
    %v148 = vld [vmem:[%s147] ss:$-1 sm:$0xff]
    %v149 = vrot.slane %v148, 1
    %150 = vst [vmem:[%s145] sm:$0xff] %v149
    %s151 = scalar_lea.vmem %s146, 8 [#allocation0]
    %s152 = scalar_lea.vmem %s151, 7 [#allocation0]
    %v153 = vld [vmem:[%s152] ss:$-1 sm:$0xff]
    %v154 = vrot.slane %v153, 1
    %v155 = vlaneseq
    %v156 = vshrl.u32 %v155, 7
    %vm157 = vcmp.lt.s32.totalorder %v156, 7
    %158 = vst.msk [vmem:[%s145] sm:$0xff] %vm157, %v154
    %s159 = scalar_lea.vmem [#allocation1], 56
    %s160 = scalar_lea.vmem [#allocation0], 112
    %s161 = scalar_lea.vmem %s160, 7 [#allocation0]
    %v162 = vld [vmem:[%s161] ss:$-1 sm:$0xff]
    %v163 = vrot.slane %v162, 1
    %164 = vst [vmem:[%s159] sm:$0xff] %v163
    %s165 = scalar_lea.vmem %s160, 8 [#allocation0]
    %s166 = scalar_lea.vmem %s165, 7 [#allocation0]
    %v167 = vld [vmem:[%s166] ss:$-1 sm:$0xff]
    %v168 = vrot.slane %v167, 1
    %v169 = vlaneseq
    %v170 = vshrl.u32 %v169, 7
    %vm171 = vcmp.lt.s32.totalorder %v170, 7
    %172 = vst.msk [vmem:[%s159] sm:$0xff] %vm171, %v168
    // Predicated region
    $region36: #{reverse.5} parent=1 // pred_check
      _
    $region37: #{reverse.5} parent=1 // pred_check_branch
      %174 = sbr.rel (0) target = $region39
    $region38: #{reverse.5} parent=1 // pred_region
      // Predicated region
      $region40: #{reverse.5} parent=38 // pred_check
        _
      $region41: #{reverse.5} parent=38 // pred_check_branch
        %176 = sbr.rel (0) target = $region43
      $region42: #{reverse.5} parent=38 // pred_region
        // Predicated region
        $region55: #{reverse.5} parent=42 // pred_check
          _
        $region56: #{reverse.5} parent=42 // pred_check_branch
          %205 = sbr.rel (0) target = $region58
        $region57: #{reverse.5} parent=42 // pred_region
          loop: start=0, step=1, limit=1
          $region59: #{reverse.5} parent=57 // loop_pre_header
            _
          $region60: #{reverse.5} parent=57 // loop_header
            %s207 = sphi 0, %s211
            %p208 = scmp.ge.s32.totalorder %s207, 1
            %s212 = sphi [#allocation1], [#allocation1]
            %s213 = sphi %s1, %s1
          $region61: #{reverse.5} parent=57 // loop_header_branch
            %210 = sbr.rel (%p208) target = $region65
          $region62: #{reverse.5} parent=57 // loop_body
            %v214 = vld [vmem:[%s212] sm:$0xff]
            %215 = vst [vmem:[%s213] sm:$0xff] %v214
            %v216 = vld [vmem:[%s212 + $0x8] sm:$0xff]
            %217 = vst [vmem:[%s213 + $0x8] sm:$0xff] %v216
            %v218 = vld [vmem:[%s212 + $0x10] sm:$0xff]
            %219 = vst [vmem:[%s213 + $0x10] sm:$0xff] %v218
            %v220 = vld [vmem:[%s212 + $0x18] sm:$0xff]
            %221 = vst [vmem:[%s213 + $0x18] sm:$0xff] %v220
            %v222 = vld [vmem:[%s212 + $0x20] sm:$0xff]
            %223 = vst [vmem:[%s213 + $0x20] sm:$0xff] %v222
            %v224 = vld [vmem:[%s212 + $0x28] sm:$0xff]
            %225 = vst [vmem:[%s213 + $0x28] sm:$0xff] %v224
            %v226 = vld [vmem:[%s212 + $0x30] sm:$0xff]
            %227 = vst [vmem:[%s213 + $0x30] sm:$0xff] %v226
            %v228 = vld [vmem:[%s212 + $0x38] sm:$0xff]
            %229 = vst [vmem:[%s213 + $0x38] sm:$0xff] %v228
          $region63: #{reverse.5} parent=57 // loop_footer
            %s211 = sadd.s32 1, %s207
          $region64: #{reverse.5} parent=57 // loop_footer_branch
            %206 = sbr.rel target = $region60
          $region65: #{reverse.5} parent=57 // loop_exit
            _
        $region58: #{reverse.5} parent=42 // pred_fallthru
          _
        // Predicated region
        $region66: #{reverse.5} parent=42 // pred_check
          _
        $region67: #{reverse.5} parent=42 // pred_check_branch
          %231 = sbr.rel target = $region69
        $region68: #{reverse.5} parent=42 // pred_region
          _
        $region69: #{reverse.5} parent=42 // pred_fallthru
          _
      $region43: #{reverse.5} parent=38 // pred_fallthru
        _
      // Predicated region
      $region44: #{reverse.5} parent=38 // pred_check
        _
      $region45: #{reverse.5} parent=38 // pred_check_branch
        %178 = sbr.rel target = $region47
      $region46: #{reverse.5} parent=38 // pred_region
        loop: start=0, step=1, limit=1
        $region48: #{reverse.5} parent=46 // loop_pre_header
          _
        $region49: #{reverse.5} parent=46 // loop_header
          %s181 = sphi 0, %s185
          %p182 = scmp.ge.s32.totalorder %s181, 1
          %s186 = sphi [#allocation1], [#allocation1]
          %s187 = sphi %s1, %s1
        $region50: #{reverse.5} parent=46 // loop_header_branch
          %184 = sbr.rel (%p182) target = $region54
        $region51: #{reverse.5} parent=46 // loop_body
          %v188 = vld [vmem:[%s186] sm:$0xff]
          %189 = vst [vmem:[%s187] sm:$0xff] %v188
          %v190 = vld [vmem:[%s186 + $0x8] sm:$0xff]
          %191 = vst [vmem:[%s187 + $0x8] sm:$0xff] %v190
          %v192 = vld [vmem:[%s186 + $0x10] sm:$0xff]
          %193 = vst [vmem:[%s187 + $0x10] sm:$0xff] %v192
          %v194 = vld [vmem:[%s186 + $0x18] sm:$0xff]
          %195 = vst [vmem:[%s187 + $0x18] sm:$0xff] %v194
          %v196 = vld [vmem:[%s186 + $0x20] sm:$0xff]
          %197 = vst [vmem:[%s187 + $0x20] sm:$0xff] %v196
          %v198 = vld [vmem:[%s186 + $0x28] sm:$0xff]
          %199 = vst [vmem:[%s187 + $0x28] sm:$0xff] %v198
          %v200 = vld [vmem:[%s186 + $0x30] sm:$0xff]
          %201 = vst [vmem:[%s187 + $0x30] sm:$0xff] %v200
          %v202 = vld [vmem:[%s186 + $0x38] sm:$0xff]
          %203 = vst [vmem:[%s187 + $0x38] sm:$0xff] %v202
        $region52: #{reverse.5} parent=46 // loop_footer
          %s185 = sadd.s32 1, %s181
        $region53: #{reverse.5} parent=46 // loop_footer_branch
          %180 = sbr.rel target = $region49
        $region54: #{reverse.5} parent=46 // loop_exit
          _
      $region47: #{reverse.5} parent=38 // pred_fallthru
        _
    $region39: #{reverse.5} parent=1 // pred_fallthru
      _
    %232 = vnop

// kernel: dblock_forward.4
$region0: #{dblock_forward.4}
  #allocation0 [shape = 'u32[]', space=smem, size = 0x4, offset = 0x4, fixed_abs, tag = 'smem constant byte address 0x4 - core index']
  #allocation1 [shape = 'u32[144,128]{1,0:T(1,128)}', space=vmem, size = 0x12000, scoped, tag = 'internal scratch']
  %s0 = inlined_call_operand.vmem [shape: f32[2,8,256], index: 0, kind: input, shape index: {}]
  %s1 = inlined_call_operand.vmem [shape: bf16[8,8], index: 1, kind: input, shape index: {}]
  %s2 = inlined_call_operand.vmem [shape: bf16[8,8], index: 2, kind: input, shape index: {}]
  %s3 = inlined_call_operand.vmem [shape: f32[2,8,256], index: 3, kind: output, shape index: {}]
  %s4 = sld [smem:[#allocation0]]
  $region45: #{dblock_forward.4} parent=0
    _
  %s6 = ssub.s32 1, %s4
  %s7 = scalar_select 0, %s6, %s4
  loop: start=0, step=1, limit=4
  $region2: #{dblock_forward.4} parent=0 // loop_pre_header
    _
  $region3: #{dblock_forward.4} parent=0 // loop_header
    %s9 = sphi 0, %s13
    %p10 = scmp.ge.s32.totalorder %s9, 4
    %s16 = sphi 0, %s28
    %s17 = sphi 0, %s24
    %s18 = sphi 0, %s16
    %s19 = sphi 0, %s17
    %s20 = sphi 0, %s18
    %s21 = sphi 0, %s19
    %s33 = sphi 0, %s35
    %s36 = sphi 0, %s33
    %s37 = sphi 0, %s36
    %s53 = sphi 0, %s37
    %s57 = sphi 0, %s57
    %s59 = sphi 0, %s57
    %s60 = sphi 0, %s59
    %s74 = sphi 0, %s60
    %s78 = sphi 0, %s78
    %s80 = sphi 0, %s78
    %s81 = sphi 0, %s80
    %s95 = sphi 0, %s81
    %s103 = sphi 0, %s105
    %s106 = sphi 0, %s103
    %s107 = sphi 0, %s106
    %s123 = sphi 0, %s107
  $region4: #{dblock_forward.4} parent=0 // loop_header_branch
    %12 = sbr.rel (%p10) target = $region8
  $region5: #{dblock_forward.4} parent=0 // loop_body
    %s14 = ssub.s32 %s9, 1
    %s15 = ssub.s32 %s9, 2
    %s22 = sadd.s32 1, %s17
    %p23 = scmp.ge.s32.totalorder %s22, 1
    %s24 = scalar_select %p23, 0, %s22
    %s25 = sadd.s32 1, %s16
    %s26 = scalar_select %p23, %s25, %s16
    %p27 = scmp.ge.s32.totalorder %s26, 2
    %s28 = scalar_select %p27, 0, %s26
    %s29 = ssub.s32 %s16, %s28
    %s30 = ssub.s32 %s17, %s24
    %s31 = sor.u32 %s29, %s30
    %p32 = scmp.eq.s32.totalorder %s31, 0
    %s34 = sadd.s32 %s33, 1
    %s35 = scalar_select %p32, %s33, %s34
    %p38 = pneg %p32
    %p39 = scmp.eq.s32.totalorder %s9, 1
    %p40 = por %p38, %p39
    %p41 = scmp.ne.s32.totalorder %s33, %s36
    %p42 = scmp.eq.s32.totalorder %s9, 0
    %p43 = por %p41, %p42
    %p44 = scmp.ne.s32.totalorder %s33, %s36
    %p45 = scmp.eq.s32.totalorder %s14, 1
    %p46 = por %p44, %p45
    %p47 = scmp.ne.s32.totalorder %s36, %s37
    %p48 = scmp.eq.s32.totalorder %s14, 0
    %p49 = por %p47, %p48
    %p50 = scmp.ne.s32.totalorder %s36, %s37
    %p51 = scmp.eq.s32.totalorder %s15, 1
    %p52 = por %p50, %p51
    %p54 = scmp.ne.s32.totalorder %s37, %s53
    %p55 = scmp.eq.s32.totalorder %s15, 0
    %p56 = por %p54, %p55
    %s58 = sadd.s32 %s57, 1
    %p61 = scmp.eq.s32.totalorder %s9, 1
    %p62 = scmp.ne.s32.totalorder %s57, %s59
    %p63 = scmp.eq.s32.totalorder %s9, 0
    %p64 = por %p62, %p63
    %p65 = scmp.ne.s32.totalorder %s57, %s59
    %p66 = scmp.eq.s32.totalorder %s14, 1
    %p67 = por %p65, %p66
    %p68 = scmp.ne.s32.totalorder %s59, %s60
    %p69 = scmp.eq.s32.totalorder %s14, 0
    %p70 = por %p68, %p69
    %p71 = scmp.ne.s32.totalorder %s59, %s60
    %p72 = scmp.eq.s32.totalorder %s15, 1
    %p73 = por %p71, %p72
    %p75 = scmp.ne.s32.totalorder %s60, %s74
    %p76 = scmp.eq.s32.totalorder %s15, 0
    %p77 = por %p75, %p76
    %s79 = sadd.s32 %s78, 1
    %p82 = scmp.eq.s32.totalorder %s9, 1
    %p83 = scmp.ne.s32.totalorder %s78, %s80
    %p84 = scmp.eq.s32.totalorder %s9, 0
    %p85 = por %p83, %p84
    %p86 = scmp.ne.s32.totalorder %s78, %s80
    %p87 = scmp.eq.s32.totalorder %s14, 1
    %p88 = por %p86, %p87
    %p89 = scmp.ne.s32.totalorder %s80, %s81
    %p90 = scmp.eq.s32.totalorder %s14, 0
    %p91 = por %p89, %p90
    %p92 = scmp.ne.s32.totalorder %s80, %s81
    %p93 = scmp.eq.s32.totalorder %s15, 1
    %p94 = por %p92, %p93
    %p96 = scmp.ne.s32.totalorder %s81, %s95
    %p97 = scmp.eq.s32.totalorder %s15, 0
    %p98 = por %p96, %p97
    %s99 = ssub.s32 %s16, %s28
    %s100 = ssub.s32 %s17, %s24
    %s101 = sor.u32 %s99, %s100
    %p102 = scmp.eq.s32.totalorder %s101, 0
    %s104 = sadd.s32 %s103, 1
    %s105 = scalar_select %p102, %s103, %s104
    %p108 = pneg %p102
    %p109 = scmp.eq.s32.totalorder %s9, 1
    %p110 = por %p108, %p109
    %p111 = scmp.ne.s32.totalorder %s103, %s106
    %p112 = scmp.eq.s32.totalorder %s9, 0
    %p113 = por %p111, %p112
    %p114 = scmp.ne.s32.totalorder %s103, %s106
    %p115 = scmp.eq.s32.totalorder %s14, 1
    %p116 = por %p114, %p115
    %p117 = scmp.ne.s32.totalorder %s106, %s107
    %p118 = scmp.eq.s32.totalorder %s14, 0
    %p119 = por %p117, %p118
    %p120 = scmp.ne.s32.totalorder %s106, %s107
    %p121 = scmp.eq.s32.totalorder %s15, 1
    %p122 = por %p120, %p121
    %p124 = scmp.ne.s32.totalorder %s107, %s123
    %p125 = scmp.eq.s32.totalorder %s15, 0
    %p126 = por %p124, %p125
    %p127 = scmp.le.s32.totalorder 1, %s9
    %p128 = scmp.lt.s32.totalorder %s9, 3
    %p129 = pnand %p127, %p128
    %p130 = pneg %p129
    // Predicated region
    $region9: #{dblock_forward.4} parent=5 // pred_check
      _
    $region10: #{dblock_forward.4} parent=5 // pred_check_branch
      %132 = sbr.rel (%p129) target = $region12
    $region11: #{dblock_forward.4} parent=5 // pred_region
      %s133 = ssub.s32 %s9, 1
      // Predicated region
      $region13: #{dblock_forward.4} parent=11 // pred_check
        %p134 = pneg %p70
      $region14: #{dblock_forward.4} parent=11 // pred_check_branch
        %136 = sbr.rel (%p134) target = $region16
      $region15: #{dblock_forward.4} parent=11 // pred_region
        _
      $region16: #{dblock_forward.4} parent=11 // pred_fallthru
        _
      // Predicated region
      $region17: #{dblock_forward.4} parent=11 // pred_check
        %p137 = pneg %p91
      $region18: #{dblock_forward.4} parent=11 // pred_check_branch
        %139 = sbr.rel (%p137) target = $region20
      $region19: #{dblock_forward.4} parent=11 // pred_region
        _
      $region20: #{dblock_forward.4} parent=11 // pred_fallthru
        _
    $region12: #{dblock_forward.4} parent=5 // pred_fallthru
      _
    %p140 = scmp.lt.s32.totalorder %s9, 2
    // Predicated region
    $region21: #{dblock_forward.4} parent=5 // pred_check
      %p141 = pneg %p140
    $region22: #{dblock_forward.4} parent=5 // pred_check_branch
      %143 = sbr.rel (%p141) target = $region24
    $region23: #{dblock_forward.4} parent=5 // pred_region
      // Predicated region
      $region25: #{dblock_forward.4} parent=23 // pred_check
        %p144 = pneg %p43
      $region26: #{dblock_forward.4} parent=23 // pred_check_branch
        %146 = sbr.rel (%p144) target = $region28
      $region27: #{dblock_forward.4} parent=23 // pred_region
        %s147 = smul.u32 2, %s17
        %p148 = scmp.lt.s32.totalorder %s16, 1
        %s149 = scalar_select %p148, %s16, 1
        %p150 = scmp.lt.s32.totalorder %s147, 1
        %s151 = scalar_select %p150, %s147, 1
        %s152 = smul.addr %s149, 2
        %s153 = sadd.s32 %s151, %s152
        %s154 = smul.addr %s153, 8
        %s155 = scalar_lea.vmem %s0, %s154
        %s156 = smul.u32 2, %s17
      $region28: #{dblock_forward.4} parent=23 // pred_fallthru
        _
    $region24: #{dblock_forward.4} parent=5 // pred_fallthru
      _
    %p157 = scmp.le.s32.totalorder 1, %s9
    %p158 = scmp.lt.s32.totalorder %s9, 3
    %p159 = pnand %p157, %p158
    %p160 = pneg %p159
    // Predicated region
    $region29: #{dblock_forward.4} parent=5 // pred_check
      _
    $region30: #{dblock_forward.4} parent=5 // pred_check_branch
      %162 = sbr.rel (%p159) target = $region32
    $region31: #{dblock_forward.4} parent=5 // pred_region
      %s163 = ssub.s32 %s9, 1
      %s164 = smul.u32 2, %s19
      %p165 = scmp.lt.s32.totalorder %s18, 1
      %s166 = scalar_select %p165, %s18, 1
      %p167 = scmp.lt.s32.totalorder %s164, 1
      %s168 = scalar_select %p167, %s164, 1
      %s169 = smul.addr %s166, 2
      %s170 = sadd.s32 %s168, %s169
      %s171 = smul.addr %s170, 8
      %s172 = scalar_lea.vmem %s0, %s171
      %p173 = pneg %p49
      %p174 = pneg %p46
      %p175 = pneg %p70
      %p176 = pneg %p67
      %p177 = pneg %p91
      %p178 = pneg %p88
      %p179 = pneg %p119
      %p180 = pneg %p116
      %s181 = smul.u32 2, %s19
      %p182 = scmp.lt.s32.totalorder %s18, 1
      %s183 = scalar_select %p182, %s18, 1
      %p184 = scmp.lt.s32.totalorder %s181, 1
      %s185 = scalar_select %p184, %s181, 1
      %s186 = smul.addr %s183, 2
      %s187 = sadd.s32 %s185, %s186
      %s188 = smul.addr %s187, 8
      %s189 = scalar_lea.vmem %s3, %s188
      %s190 = smul.u32 2, %s19
      %p191 = scmp.lt.s32.totalorder %s18, 1
      %s192 = scalar_select %p191, %s18, 1
      %p193 = scmp.lt.s32.totalorder %s190, 1
      %s194 = scalar_select %p193, %s190, 1
      %s195 = smul.addr %s192, 2
      %s196 = sadd.s32 %s194, %s195
      %s197 = smul.addr %s196, 8
      %s198 = scalar_lea.vmem %s0, %s197
      %s199 = smul.u32 2, %s19
      %s200 = smul.u32 2, %s19
      %p201 = scmp.lt.s32.totalorder %s18, 1
      %s202 = scalar_select %p201, %s18, 1
      %p203 = scmp.lt.s32.totalorder %s200, 1
      %s204 = scalar_select %p203, %s200, 1
      %s205 = smul.addr %s202, 2
      %s206 = sadd.s32 %s204, %s205
      %s207 = smul.addr %s206, 8
      %s208 = scalar_lea.vmem %s3, %s207
      %s209 = smul.u32 2, %s19
      %v211 = vld [vmem:[%s198] sm:$0xff]
      %v212 = vld [vmem:[%s198 + $0x8] sm:$0xff]
      %v213 = vpack.c.bf16 %v211, %v211
      %v214 = vpack.c.bf16 %v212, %v212
      %v215 = vld [vmem:[%s1] sm:$0xf]
      %vm216 = vcmask 64512
      %v218 = vsel %vm216, %v215, 0
      %vm220 = vcmask 1043456
      %v222 = vsel %vm220, %v213, 0
      %v225 = vsel %vm220, %v214, 0
      %227 = vmatprep.subr.bf16.mxu0 %v225
      %228 = vmatpush1.bf16.msra.mxu0 %v222
      %229 = vmatprep.subr.bf16.mxu0 0
      %230 = vmatpush1.bf16.msra.mxu0 0
      %231 = vmatprep.subr.bf16.mxu0 0
      %232 = vmatpush1.bf16.msra.mxu0 0
      %233 = vmatprep.subr.bf16.mxu0 0
      %234 = vmatpush1.bf16.msra.mxu0 0
      %235 = vmatprep.subr.bf16.mxu0 0
      %236 = vmatpush1.bf16.msra.mxu0 0
      %237 = vmatprep.subr.bf16.mxu0 0
      %238 = vmatpush1.bf16.msra.mxu0 0
      %239 = vmatprep.subr.bf16.mxu0 0
      %240 = vmatpush1.bf16.msra.mxu0 0
      %241 = vmatprep.subr.bf16.mxu0 0
      %242 = vmatpush1.bf16.msra.mxu0 0
      %243 = vmatprep.subr.bf16.mxu0 0
      %244 = vmatpush1.bf16.msra.mxu0 0
      %245 = vmatprep.subr.bf16.mxu0 0
      %246 = vmatpush1.bf16.msra.mxu0 0
      %247 = vmatprep.subr.bf16.mxu0 0
      %248 = vmatpush1.bf16.msra.mxu0 0
      %249 = vmatprep.subr.bf16.mxu0 0
      %250 = vmatpush1.bf16.msra.mxu0 0
      %251 = vmatprep.subr.bf16.mxu0 0
      %252 = vmatpush1.bf16.msra.mxu0 0
      %253 = vmatprep.subr.bf16.mxu0 0
      %254 = vmatpush1.bf16.msra.mxu0 0
      %255 = vmatprep.subr.bf16.mxu0 0
      %256 = vmatpush1.bf16.msra.mxu0 0
      %257 = vmatprep.subr.bf16.mxu0 0
      %258 = vmatpush1.bf16.msra.mxu0 0
      %259 = vmatprep.mubr.bf16.mxu0 0
      %260 = vmatmul.mubr.bf16.gmra.mrb[0].mxu0 %v218
      %v261 = vpop.f32.mrb[0].mxu0
      %v262 = vadd.f32 0.0, %v261
      %v263 = vpop.f32.mrb[0].mxu0
      %v264 = vadd.f32 0.0, %v263
      %v265 = vpop.f32.mrb[0].mxu0
      %v266 = vpop.f32.mrb[0].mxu0
      %267 = vdwg.mxu0
      %v268 = vmax.f32 %v262, 0.0
      %v269 = vmax.f32 %v264, 0.0
      %v270 = vld [vmem:[%s2] sm:$0xf]
      %v271 = vpack.c.bf16 %v268, %v268
      %v272 = vpack.c.bf16 %v269, %v269
      %v274 = vsel %vm216, %v270, 0
      %v277 = vsel %vm220, %v271, 0
      %v280 = vsel %vm220, %v272, 0
      %282 = vmatprep.subr.bf16.mxu0 %v280
      %283 = vmatpush1.bf16.msra.mxu0 %v277
      %284 = vmatprep.subr.bf16.mxu0 0
      %285 = vmatpush1.bf16.msra.mxu0 0
      %286 = vmatprep.subr.bf16.mxu0 0
      %287 = vmatpush1.bf16.msra.mxu0 0
      %288 = vmatprep.subr.bf16.mxu0 0
      %289 = vmatpush1.bf16.msra.mxu0 0
      %290 = vmatprep.subr.bf16.mxu0 0
      %291 = vmatpush1.bf16.msra.mxu0 0
      %292 = vmatprep.subr.bf16.mxu0 0
      %293 = vmatpush1.bf16.msra.mxu0 0
      %294 = vmatprep.subr.bf16.mxu0 0
      %295 = vmatpush1.bf16.msra.mxu0 0
      %296 = vmatprep.subr.bf16.mxu0 0
      %297 = vmatpush1.bf16.msra.mxu0 0
      %298 = vmatprep.subr.bf16.mxu0 0
      %299 = vmatpush1.bf16.msra.mxu0 0
      %300 = vmatprep.subr.bf16.mxu0 0
      %301 = vmatpush1.bf16.msra.mxu0 0
      %302 = vmatprep.subr.bf16.mxu0 0
      %303 = vmatpush1.bf16.msra.mxu0 0
      %304 = vmatprep.subr.bf16.mxu0 0
      %305 = vmatpush1.bf16.msra.mxu0 0
      %306 = vmatprep.subr.bf16.mxu0 0
      %307 = vmatpush1.bf16.msra.mxu0 0
      %308 = vmatprep.subr.bf16.mxu0 0
      %309 = vmatpush1.bf16.msra.mxu0 0
      %310 = vmatprep.subr.bf16.mxu0 0
      %311 = vmatpush1.bf16.msra.mxu0 0
      %312 = vmatprep.subr.bf16.mxu0 0
      %313 = vmatpush1.bf16.msra.mxu0 0
      %314 = vmatprep.mubr.bf16.mxu0 0
      %315 = vmatmul.mubr.bf16.gmra.mrb[0].mxu0 %v274
      %v316 = vpop.f32.mrb[0].mxu0
      %v317 = vadd.f32 0.0, %v316
      %v318 = vpop.f32.mrb[0].mxu0
      %v319 = vadd.f32 0.0, %v318
      %v320 = vpop.f32.mrb[0].mxu0
      %v321 = vpop.f32.mrb[0].mxu0
      %322 = vdwg.mxu0
      %323 = vst [vmem:[%s208] sm:$0xff] %v317
      %324 = vst [vmem:[%s208 + $0x8] sm:$0xff] %v319
      %s325 = smul.u32 2, %s19
      %p326 = scmp.lt.s32.totalorder %s18, 1
      %s327 = scalar_select %p326, %s18, 1
      %p328 = scmp.lt.s32.totalorder %s325, 1
      %s329 = scalar_select %p328, %s325, 1
      %s330 = smul.addr %s327, 2
      %s331 = sadd.s32 %s329, %s330
      %s332 = smul.addr %s331, 8
      %s333 = scalar_lea.vmem %s3, %s332
      // Predicated region
      $region33: #{dblock_forward.4} parent=31 // pred_check
        %p334 = pneg %p116
      $region34: #{dblock_forward.4} parent=31 // pred_check_branch
        %336 = sbr.rel (%p334) target = $region36
      $region35: #{dblock_forward.4} parent=31 // pred_region
        %s337 = smul.u32 2, %s19
      $region36: #{dblock_forward.4} parent=31 // pred_fallthru
        _
    $region32: #{dblock_forward.4} parent=5 // pred_fallthru
      _
    %p338 = scmp.le.s32.totalorder 2, %s9
    // Predicated region
    $region37: #{dblock_forward.4} parent=5 // pred_check
      %p339 = pneg %p338
    $region38: #{dblock_forward.4} parent=5 // pred_check_branch
      %341 = sbr.rel (%p339) target = $region40
    $region39: #{dblock_forward.4} parent=5 // pred_region
      %s342 = ssub.s32 %s9, 2
      // Predicated region
      $region41: #{dblock_forward.4} parent=39 // pred_check
        %p343 = pneg %p122
      $region42: #{dblock_forward.4} parent=39 // pred_check_branch
        %345 = sbr.rel (%p343) target = $region44
      $region43: #{dblock_forward.4} parent=39 // pred_region
        %s346 = smul.u32 2, %s21
        %p347 = scmp.lt.s32.totalorder %s20, 1
        %s348 = scalar_select %p347, %s20, 1
        %p349 = scmp.lt.s32.totalorder %s346, 1
        %s350 = scalar_select %p349, %s346, 1
        %s351 = smul.addr %s348, 2
        %s352 = sadd.s32 %s350, %s351
        %s353 = smul.addr %s352, 8
        %s354 = scalar_lea.vmem %s3, %s353
      $region44: #{dblock_forward.4} parent=39 // pred_fallthru
        _
    $region40: #{dblock_forward.4} parent=5 // pred_fallthru
      _
  $region6: #{dblock_forward.4} parent=0 // loop_footer
    %s13 = sadd.s32 1, %s9
  $region7: #{dblock_forward.4} parent=0 // loop_footer_branch
    %8 = sbr.rel target = $region3
  $region8: #{dblock_forward.4} parent=0 // loop_exit
    _

// kernel: dblock_forward.5
$region0: #{dblock_forward.5}
  #allocation0 [shape = 'u32[]', space=smem, size = 0x4, offset = 0x4, fixed_abs, tag = 'smem constant byte address 0x4 - core index']
  #allocation1 [shape = 'u32[144,128]{1,0:T(1,128)}', space=vmem, size = 0x12000, scoped, tag = 'internal scratch']
  #allocation2 [shape = 'f32[36,288]{1,0:T(8,128)}', space=vmem, size = 0xf000, scoped, tag = 'scratch operand']
  #allocation3 [shape = 'f32[4,326]{1,0:T(4,128)}', space=vmem, size = 0x1800, scoped, tag = 'scratch operand']
  %s0 = inlined_call_operand.vmem [shape: f32[2,4,324], index: 0, kind: input, shape index: {}]
  %s1 = inlined_call_operand.vmem [shape: f32[2,4,288], index: 1, kind: input, shape index: {}]
  %s2 = inlined_call_operand.vmem [shape: f32[1,286], index: 2, kind: input, shape index: {}]
  %s3 = inlined_call_operand.vmem [shape: bf16[4,36], index: 3, kind: input, shape index: {}]
  %s4 = inlined_call_operand.vmem [shape: f32[4,1], index: 4, kind: input, shape index: {}]
  %s5 = inlined_call_operand.vmem [shape: bf16[4,36], index: 5, kind: input, shape index: {}]
  %s6 = inlined_call_operand.vmem [shape: f32[4,1], index: 6, kind: input, shape index: {}]
  %s7 = inlined_call_operand.vmem [shape: f32[2,4,288], index: 7, kind: output, shape index: {}]
  %s8 = sld [smem:[#allocation0]]
  $region61: #{dblock_forward.5} parent=0
    _
  %s10 = ssub.s32 1, %s8
  %s11 = scalar_select 0, %s10, %s8
  loop: start=0, step=1, limit=4
  $region2: #{dblock_forward.5} parent=0 // loop_pre_header
    _
  $region3: #{dblock_forward.5} parent=0 // loop_header
    %s13 = sphi 0, %s17
    %p14 = scmp.ge.s32.totalorder %s13, 4
    %s23 = sphi 0, %s25
    %s26 = sphi 0, %s23
    %s27 = sphi 0, %s26
    %s43 = sphi 0, %s27
    %s49 = sphi 0, %s51
    %s52 = sphi 0, %s49
    %s53 = sphi 0, %s52
    %s69 = sphi 0, %s53
    %s73 = sphi 0, %s73
    %s75 = sphi 0, %s73
    %s76 = sphi 0, %s75
    %s90 = sphi 0, %s76
    %s94 = sphi 0, %s94
    %s96 = sphi 0, %s94
    %s97 = sphi 0, %s96
    %s111 = sphi 0, %s97
    %s115 = sphi 0, %s115
    %s117 = sphi 0, %s115
    %s118 = sphi 0, %s117
    %s132 = sphi 0, %s118
    %s136 = sphi 0, %s136
    %s138 = sphi 0, %s136
    %s139 = sphi 0, %s138
    %s153 = sphi 0, %s139
    %s157 = sphi 0, %s157
    %s159 = sphi 0, %s157
    %s160 = sphi 0, %s159
    %s174 = sphi 0, %s160
    %s180 = sphi 0, %s182
    %s183 = sphi 0, %s180
    %s184 = sphi 0, %s183
    %s200 = sphi 0, %s184
  $region4: #{dblock_forward.5} parent=0 // loop_header_branch
    %16 = sbr.rel (%p14) target = $region8
  $region5: #{dblock_forward.5} parent=0 // loop_body
    %s18 = ssub.s32 %s13, 1
    %s19 = ssub.s32 %s13, 2
    %s20 = sadd.s32 %s13, 1
    %s21 = ssub.s32 %s13, %s20
    %p22 = scmp.eq.s32.totalorder %s21, 0
    %s24 = sadd.s32 %s23, 1
    %s25 = scalar_select %p22, %s23, %s24
    %p28 = pneg %p22
    %p29 = scmp.eq.s32.totalorder %s13, 1
    %p30 = por %p28, %p29
    %p31 = scmp.ne.s32.totalorder %s23, %s26
    %p32 = scmp.eq.s32.totalorder %s13, 0
    %p33 = por %p31, %p32
    %p34 = scmp.ne.s32.totalorder %s23, %s26
    %p35 = scmp.eq.s32.totalorder %s18, 1
    %p36 = por %p34, %p35
    %p37 = scmp.ne.s32.totalorder %s26, %s27
    %p38 = scmp.eq.s32.totalorder %s18, 0
    %p39 = por %p37, %p38
    %p40 = scmp.ne.s32.totalorder %s26, %s27
    %p41 = scmp.eq.s32.totalorder %s19, 1
    %p42 = por %p40, %p41
    %p44 = scmp.ne.s32.totalorder %s27, %s43
    %p45 = scmp.eq.s32.totalorder %s19, 0
    %p46 = por %p44, %p45
    %s47 = ssub.s32 %s13, %s20
    %p48 = scmp.eq.s32.totalorder %s47, 0
    %s50 = sadd.s32 %s49, 1
    %s51 = scalar_select %p48, %s49, %s50
    %p54 = pneg %p48
    %p55 = scmp.eq.s32.totalorder %s13, 1
    %p56 = por %p54, %p55
    %p57 = scmp.ne.s32.totalorder %s49, %s52
    %p58 = scmp.eq.s32.totalorder %s13, 0
    %p59 = por %p57, %p58
    %p60 = scmp.ne.s32.totalorder %s49, %s52
    %p61 = scmp.eq.s32.totalorder %s18, 1
    %p62 = por %p60, %p61
    %p63 = scmp.ne.s32.totalorder %s52, %s53
    %p64 = scmp.eq.s32.totalorder %s18, 0
    %p65 = por %p63, %p64
    %p66 = scmp.ne.s32.totalorder %s52, %s53
    %p67 = scmp.eq.s32.totalorder %s19, 1
    %p68 = por %p66, %p67
    %p70 = scmp.ne.s32.totalorder %s53, %s69
    %p71 = scmp.eq.s32.totalorder %s19, 0
    %p72 = por %p70, %p71
    %s74 = sadd.s32 %s73, 1
    %p77 = scmp.eq.s32.totalorder %s13, 1
    %p78 = scmp.ne.s32.totalorder %s73, %s75
    %p79 = scmp.eq.s32.totalorder %s13, 0
    %p80 = por %p78, %p79
    %p81 = scmp.ne.s32.totalorder %s73, %s75
    %p82 = scmp.eq.s32.totalorder %s18, 1
    %p83 = por %p81, %p82
    %p84 = scmp.ne.s32.totalorder %s75, %s76
    %p85 = scmp.eq.s32.totalorder %s18, 0
    %p86 = por %p84, %p85
    %p87 = scmp.ne.s32.totalorder %s75, %s76
    %p88 = scmp.eq.s32.totalorder %s19, 1
    %p89 = por %p87, %p88
    %p91 = scmp.ne.s32.totalorder %s76, %s90
    %p92 = scmp.eq.s32.totalorder %s19, 0
    %p93 = por %p91, %p92
    %s95 = sadd.s32 %s94, 1
    %p98 = scmp.eq.s32.totalorder %s13, 1
    %p99 = scmp.ne.s32.totalorder %s94, %s96
    %p100 = scmp.eq.s32.totalorder %s13, 0
    %p101 = por %p99, %p100
    %p102 = scmp.ne.s32.totalorder %s94, %s96
    %p103 = scmp.eq.s32.totalorder %s18, 1
    %p104 = por %p102, %p103
    %p105 = scmp.ne.s32.totalorder %s96, %s97
    %p106 = scmp.eq.s32.totalorder %s18, 0
    %p107 = por %p105, %p106
    %p108 = scmp.ne.s32.totalorder %s96, %s97
    %p109 = scmp.eq.s32.totalorder %s19, 1
    %p110 = por %p108, %p109
    %p112 = scmp.ne.s32.totalorder %s97, %s111
    %p113 = scmp.eq.s32.totalorder %s19, 0
    %p114 = por %p112, %p113
    %s116 = sadd.s32 %s115, 1
    %p119 = scmp.eq.s32.totalorder %s13, 1
    %p120 = scmp.ne.s32.totalorder %s115, %s117
    %p121 = scmp.eq.s32.totalorder %s13, 0
    %p122 = por %p120, %p121
    %p123 = scmp.ne.s32.totalorder %s115, %s117
    %p124 = scmp.eq.s32.totalorder %s18, 1
    %p125 = por %p123, %p124
    %p126 = scmp.ne.s32.totalorder %s117, %s118
    %p127 = scmp.eq.s32.totalorder %s18, 0
    %p128 = por %p126, %p127
    %p129 = scmp.ne.s32.totalorder %s117, %s118
    %p130 = scmp.eq.s32.totalorder %s19, 1
    %p131 = por %p129, %p130
    %p133 = scmp.ne.s32.totalorder %s118, %s132
    %p134 = scmp.eq.s32.totalorder %s19, 0
    %p135 = por %p133, %p134
    %s137 = sadd.s32 %s136, 1
    %p140 = scmp.eq.s32.totalorder %s13, 1
    %p141 = scmp.ne.s32.totalorder %s136, %s138
    %p142 = scmp.eq.s32.totalorder %s13, 0
    %p143 = por %p141, %p142
    %p144 = scmp.ne.s32.totalorder %s136, %s138
    %p145 = scmp.eq.s32.totalorder %s18, 1
    %p146 = por %p144, %p145
    %p147 = scmp.ne.s32.totalorder %s138, %s139
    %p148 = scmp.eq.s32.totalorder %s18, 0
    %p149 = por %p147, %p148
    %p150 = scmp.ne.s32.totalorder %s138, %s139
    %p151 = scmp.eq.s32.totalorder %s19, 1
    %p152 = por %p150, %p151
    %p154 = scmp.ne.s32.totalorder %s139, %s153
    %p155 = scmp.eq.s32.totalorder %s19, 0
    %p156 = por %p154, %p155
    %s158 = sadd.s32 %s157, 1
    %p161 = scmp.eq.s32.totalorder %s13, 1
    %p162 = scmp.ne.s32.totalorder %s157, %s159
    %p163 = scmp.eq.s32.totalorder %s13, 0
    %p164 = por %p162, %p163
    %p165 = scmp.ne.s32.totalorder %s157, %s159
    %p166 = scmp.eq.s32.totalorder %s18, 1
    %p167 = por %p165, %p166
    %p168 = scmp.ne.s32.totalorder %s159, %s160
    %p169 = scmp.eq.s32.totalorder %s18, 0
    %p170 = por %p168, %p169
    %p171 = scmp.ne.s32.totalorder %s159, %s160
    %p172 = scmp.eq.s32.totalorder %s19, 1
    %p173 = por %p171, %p172
    %p175 = scmp.ne.s32.totalorder %s160, %s174
    %p176 = scmp.eq.s32.totalorder %s19, 0
    %p177 = por %p175, %p176
    %s178 = ssub.s32 %s13, %s20
    %p179 = scmp.eq.s32.totalorder %s178, 0
    %s181 = sadd.s32 %s180, 1
    %s182 = scalar_select %p179, %s180, %s181
    %p185 = pneg %p179
    %p186 = scmp.eq.s32.totalorder %s13, 1
    %p187 = por %p185, %p186
    %p188 = scmp.ne.s32.totalorder %s180, %s183
    %p189 = scmp.eq.s32.totalorder %s13, 0
    %p190 = por %p188, %p189
    %p191 = scmp.ne.s32.totalorder %s180, %s183
    %p192 = scmp.eq.s32.totalorder %s18, 1
    %p193 = por %p191, %p192
    %p194 = scmp.ne.s32.totalorder %s183, %s184
    %p195 = scmp.eq.s32.totalorder %s18, 0
    %p196 = por %p194, %p195
    %p197 = scmp.ne.s32.totalorder %s183, %s184
    %p198 = scmp.eq.s32.totalorder %s19, 1
    %p199 = por %p197, %p198
    %p201 = scmp.ne.s32.totalorder %s184, %s200
    %p202 = scmp.eq.s32.totalorder %s19, 0
    %p203 = por %p201, %p202
    %p204 = scmp.le.s32.totalorder 1, %s13
    %p205 = scmp.lt.s32.totalorder %s13, 3
    %p206 = pnand %p204, %p205
    %p207 = pneg %p206
    // Predicated region
    $region9: #{dblock_forward.5} parent=5 // pred_check
      _
    $region10: #{dblock_forward.5} parent=5 // pred_check_branch
      %209 = sbr.rel (%p206) target = $region12
    $region11: #{dblock_forward.5} parent=5 // pred_region
      %s210 = ssub.s32 %s13, 1
      // Predicated region
      $region13: #{dblock_forward.5} parent=11 // pred_check
        %p211 = pneg %p86
      $region14: #{dblock_forward.5} parent=11 // pred_check_branch
        %213 = sbr.rel (%p211) target = $region16
      $region15: #{dblock_forward.5} parent=11 // pred_region
        _
      $region16: #{dblock_forward.5} parent=11 // pred_fallthru
        _
      // Predicated region
      $region17: #{dblock_forward.5} parent=11 // pred_check
        %p214 = pneg %p107
      $region18: #{dblock_forward.5} parent=11 // pred_check_branch
        %216 = sbr.rel (%p214) target = $region20
      $region19: #{dblock_forward.5} parent=11 // pred_region
        _
      $region20: #{dblock_forward.5} parent=11 // pred_fallthru
        _
      // Predicated region
      $region21: #{dblock_forward.5} parent=11 // pred_check
        %p217 = pneg %p128
      $region22: #{dblock_forward.5} parent=11 // pred_check_branch
        %219 = sbr.rel (%p217) target = $region24
      $region23: #{dblock_forward.5} parent=11 // pred_region
        _
      $region24: #{dblock_forward.5} parent=11 // pred_fallthru
        _
      // Predicated region
      $region25: #{dblock_forward.5} parent=11 // pred_check
        %p220 = pneg %p149
      $region26: #{dblock_forward.5} parent=11 // pred_check_branch
        %222 = sbr.rel (%p220) target = $region28
      $region27: #{dblock_forward.5} parent=11 // pred_region
        _
      $region28: #{dblock_forward.5} parent=11 // pred_fallthru
        _
      // Predicated region
      $region29: #{dblock_forward.5} parent=11 // pred_check
        %p223 = pneg %p170
      $region30: #{dblock_forward.5} parent=11 // pred_check_branch
        %225 = sbr.rel (%p223) target = $region32
      $region31: #{dblock_forward.5} parent=11 // pred_region
        _
      $region32: #{dblock_forward.5} parent=11 // pred_fallthru
        _
    $region12: #{dblock_forward.5} parent=5 // pred_fallthru
      _
    %p226 = scmp.lt.s32.totalorder %s13, 2
    // Predicated region
    $region33: #{dblock_forward.5} parent=5 // pred_check
      %p227 = pneg %p226
    $region34: #{dblock_forward.5} parent=5 // pred_check_branch
      %229 = sbr.rel (%p227) target = $region36
    $region35: #{dblock_forward.5} parent=5 // pred_region
      // Predicated region
      $region37: #{dblock_forward.5} parent=35 // pred_check
        %p230 = pneg %p33
      $region38: #{dblock_forward.5} parent=35 // pred_check_branch
        %232 = sbr.rel (%p230) target = $region40
      $region39: #{dblock_forward.5} parent=35 // pred_region
        %p233 = scmp.lt.s32.totalorder %s13, 1
        %s234 = scalar_select %p233, %s13, 1
        %s235 = smul.addr %s234, 3
        %s236 = smul.addr %s235, 4
        %s237 = scalar_lea.vmem %s0, %s236
      $region40: #{dblock_forward.5} parent=35 // pred_fallthru
        _
      // Predicated region
      $region41: #{dblock_forward.5} parent=35 // pred_check
        %p238 = pneg %p59
      $region42: #{dblock_forward.5} parent=35 // pred_check_branch
        %240 = sbr.rel (%p238) target = $region44
      $region43: #{dblock_forward.5} parent=35 // pred_region
        %p241 = scmp.lt.s32.totalorder %s13, 1
        %s242 = scalar_select %p241, %s13, 1
        %s243 = smul.addr %s242, 3
        %s244 = smul.addr %s243, 4
        %s245 = scalar_lea.vmem %s1, %s244
      $region44: #{dblock_forward.5} parent=35 // pred_fallthru
        _
    $region36: #{dblock_forward.5} parent=5 // pred_fallthru
      _
    %p246 = scmp.le.s32.totalorder 1, %s13
    %p247 = scmp.lt.s32.totalorder %s13, 3
    %p248 = pnand %p246, %p247
    %p249 = pneg %p248
    // Predicated region
    $region45: #{dblock_forward.5} parent=5 // pred_check
      _
    $region46: #{dblock_forward.5} parent=5 // pred_check_branch
      %251 = sbr.rel (%p248) target = $region48
    $region47: #{dblock_forward.5} parent=5 // pred_region
      %s252 = ssub.s32 %s13, 1
      %p253 = scmp.lt.s32.totalorder %s18, 1
      %s254 = scalar_select %p253, %s18, 1
      %s255 = smul.addr %s254, 3
      %s256 = smul.addr %s255, 4
      %s257 = scalar_lea.vmem %s0, %s256
      %p258 = pneg %p39
      %p259 = pneg %p36
      %p260 = scmp.lt.s32.totalorder %s18, 1
      %s261 = scalar_select %p260, %s18, 1
      %s262 = smul.addr %s261, 3
      %s263 = smul.addr %s262, 4
      %s264 = scalar_lea.vmem %s1, %s263
      %p265 = pneg %p65
      %p266 = pneg %p62
      %p267 = pneg %p86
      %p268 = pneg %p83
      %p269 = pneg %p107
      %p270 = pneg %p104
      %p271 = pneg %p128
      %p272 = pneg %p125
      %p273 = pneg %p149
      %p274 = pneg %p146
      %p275 = pneg %p170
      %p276 = pneg %p167
      %p277 = pneg %p196
      %p278 = pneg %p193
      %p279 = scmp.lt.s32.totalorder %s18, 1
      %s280 = scalar_select %p279, %s18, 1
      %s281 = smul.addr %s280, 3
      %s282 = smul.addr %s281, 4
      %s283 = scalar_lea.vmem %s7, %s282
      %p284 = scmp.lt.s32.totalorder %s18, 1
      %s285 = scalar_select %p284, %s18, 1
      %s286 = smul.addr %s285, 3
      %s287 = smul.addr %s286, 4
      %s288 = scalar_lea.vmem %s0, %s287
      %p289 = scmp.lt.s32.totalorder %s18, 1
      %s290 = scalar_select %p289, %s18, 1
      %s291 = smul.addr %s290, 3
      %s292 = smul.addr %s291, 4
      %s293 = scalar_lea.vmem %s1, %s292
      %p294 = scmp.lt.s32.totalorder %s18, 1
      %s295 = scalar_select %p294, %s18, 1
      %s296 = smul.addr %s295, 3
      %s297 = smul.addr %s296, 4
      %s298 = scalar_lea.vmem %s7, %s297
      %v300 = vld [vmem:[%s288] sm:$0xff]
      %v301 = vld [vmem:[%s288 + $0x8] sm:$0xf]
      %v304 = vcombine.high %v300, %v300
      %306 = vst [vmem:[#allocation2] sm:$0xf] %v300
      %307 = vst [vmem:[#allocation2 + $0x8] sm:$0xf] %v304
      %vm308 = vcmask 240640
      %309 = vst.msk [vmem:[#allocation2 + $0x10] sm:$0xf] %vm308, %v301
      %v310 = vcombine.low %v300, %v300
      %v311 = vcombine.low %v301, %v301
      %312 = vrot.lane.b32.xlu0 %v310, 127
      %v313 = vpop.permute.xlu0 %312
      %314 = vrot.lane.b32.xlu0 %v300, 127
      %v315 = vpop.permute.xlu0 %314
      %316 = vrot.lane.b32.xlu0 %v311, 127
      %v317 = vpop.permute.xlu0 %316
      %vm318 = vcmask 1039360
      %v319 = vsel %vm318, %v313, %v315
      %v320 = vsel %vm318, %v315, %v317
      %324 = vst [vmem:[#allocation2] sm:$0xf0] %v319
      %325 = vst [vmem:[#allocation2 + $0x8] sm:$0xf0] %v320
      %vm326 = vcmask 244740
      %327 = vst.msk [vmem:[#allocation2 + $0x10] sm:$0xf0] %vm326, %v317
      %328 = vrot.lane.b32.xlu0 %v300, 126
      %v329 = vpop.permute.xlu0 %328
      %330 = vrot.lane.b32.xlu0 %v304, 126
      %v331 = vpop.permute.xlu0 %330
      %332 = vrot.lane.b32.xlu0 %v301, 126
      %v333 = vpop.permute.xlu0 %332
      %vm334 = vcmask 1031168
      %v335 = vsel %vm334, %v329, %v331
      %v336 = vsel %vm334, %v331, %v333
      %340 = vst [vmem:[#allocation2 + $0x18] sm:$0xf] %v335
      %341 = vst [vmem:[#allocation2 + $0x20] sm:$0xf] %v336
      %342 = vst.msk [vmem:[#allocation2 + $0x28] sm:$0xf] %vm308, %v333
      %343 = vrot.lane.b32.xlu0 %v310, 110
      %v344 = vpop.permute.xlu0 %343
      %345 = vrot.lane.b32.xlu0 %v300, 110
      %v346 = vpop.permute.xlu0 %345
      %347 = vrot.lane.b32.xlu0 %v311, 110
      %v348 = vpop.permute.xlu0 %347
      %vm349 = vcmask 900096
      %v350 = vsel %vm349, %v344, %v346
      %v351 = vsel %vm349, %v346, %v348
      %355 = vst [vmem:[#allocation2 + $0x18] sm:$0xf0] %v350
      %356 = vst [vmem:[#allocation2 + $0x20] sm:$0xf0] %v351
      %357 = vst.msk [vmem:[#allocation2 + $0x28] sm:$0xf0] %vm326, %v348
      %358 = vrot.lane.b32.xlu0 %v300, 109
      %v359 = vpop.permute.xlu0 %358
      %360 = vrot.lane.b32.xlu0 %v304, 109
      %v361 = vpop.permute.xlu0 %360
      %362 = vrot.lane.b32.xlu0 %v301, 109
      %v363 = vpop.permute.xlu0 %362
      %vm364 = vcmask 891904
      %v365 = vsel %vm364, %v359, %v361
      %v366 = vsel %vm364, %v361, %v363
      %370 = vst [vmem:[#allocation2 + $0x30] sm:$0xf] %v365
      %371 = vst [vmem:[#allocation2 + $0x38] sm:$0xf] %v366
      %372 = vst.msk [vmem:[#allocation2 + $0x40] sm:$0xf] %vm308, %v363
      %373 = vrot.lane.b32.xlu0 %v310, 108
      %v374 = vpop.permute.xlu0 %373
      %375 = vrot.lane.b32.xlu0 %v300, 108
      %v376 = vpop.permute.xlu0 %375
      %377 = vrot.lane.b32.xlu0 %v311, 108
      %v378 = vpop.permute.xlu0 %377
      %vm379 = vcmask 883712
      %v380 = vsel %vm379, %v374, %v376
      %v381 = vsel %vm379, %v376, %v378
      %385 = vst [vmem:[#allocation2 + $0x30] sm:$0xf0] %v380
      %386 = vst [vmem:[#allocation2 + $0x38] sm:$0xf0] %v381
      %387 = vst.msk [vmem:[#allocation2 + $0x40] sm:$0xf0] %vm326, %v378
      %388 = vrot.lane.b32.xlu0 %v300, 92
      %v389 = vpop.permute.xlu0 %388
      %390 = vrot.lane.b32.xlu0 %v304, 92
      %v391 = vpop.permute.xlu0 %390
      %392 = vrot.lane.b32.xlu0 %v301, 92
      %v393 = vpop.permute.xlu0 %392
      %vm394 = vcmask 752640
      %v395 = vsel %vm394, %v389, %v391
      %v396 = vsel %vm394, %v391, %v393
      %400 = vst [vmem:[#allocation2 + $0x48] sm:$0xf] %v395
      %401 = vst [vmem:[#allocation2 + $0x50] sm:$0xf] %v396
      %402 = vst.msk [vmem:[#allocation2 + $0x58] sm:$0xf] %vm308, %v393
      %403 = vrot.lane.b32.xlu0 %v310, 91
      %v404 = vpop.permute.xlu0 %403
      %405 = vrot.lane.b32.xlu0 %v300, 91
      %v406 = vpop.permute.xlu0 %405
      %407 = vrot.lane.b32.xlu0 %v311, 91
      %v408 = vpop.permute.xlu0 %407
      %vm409 = vcmask 744448
      %v410 = vsel %vm409, %v404, %v406
      %v411 = vsel %vm409, %v406, %v408
      %415 = vst [vmem:[#allocation2 + $0x48] sm:$0xf0] %v410
      %416 = vst [vmem:[#allocation2 + $0x50] sm:$0xf0] %v411
      %417 = vst.msk [vmem:[#allocation2 + $0x58] sm:$0xf0] %vm326, %v408
      %418 = vrot.lane.b32.xlu0 %v300, 90
      %v419 = vpop.permute.xlu0 %418
      %420 = vrot.lane.b32.xlu0 %v304, 90
      %v421 = vpop.permute.xlu0 %420
      %422 = vrot.lane.b32.xlu0 %v301, 90
      %v423 = vpop.permute.xlu0 %422
      %vm424 = vcmask 736256
      %v425 = vsel %vm424, %v419, %v421
      %v426 = vsel %vm424, %v421, %v423
      %430 = vst [vmem:[#allocation2 + $0x60] sm:$0xf] %v425
      %431 = vst [vmem:[#allocation2 + $0x68] sm:$0xf] %v426
      %432 = vst.msk [vmem:[#allocation2 + $0x70] sm:$0xf] %vm308, %v423
      %v433 = vld [vmem:[%s3] sm:$0x3]
      %v434 = vld [vmem:[#allocation2] sm:$0xff]
      %v435 = vld [vmem:[#allocation2 + $0x8] sm:$0xff]
      %v436 = vld [vmem:[#allocation2 + $0x10] sm:$0xff]
      %v437 = vld [vmem:[#allocation2 + $0x18] sm:$0xff]
      %v438 = vld [vmem:[#allocation2 + $0x20] sm:$0xff]
      %v439 = vld [vmem:[#allocation2 + $0x28] sm:$0xff]
      %v440 = vld [vmem:[#allocation2 + $0x30] sm:$0xff]
      %v441 = vld [vmem:[#allocation2 + $0x38] sm:$0xff]
      %v442 = vld [vmem:[#allocation2 + $0x40] sm:$0xff]
      %v443 = vld [vmem:[#allocation2 + $0x48] sm:$0xff]
      %v444 = vld [vmem:[#allocation2 + $0x50] sm:$0xff]
      %v445 = vld [vmem:[#allocation2 + $0x58] sm:$0xff]
      %v446 = vld [vmem:[#allocation2 + $0x60] sm:$0xf]
      %v447 = vld [vmem:[#allocation2 + $0x68] sm:$0xf]
      %v448 = vld [vmem:[#allocation2 + $0x70] sm:$0xf]
      %v449 = vpack.c.bf16 %v437, %v434
      %v450 = vpack.c.bf16 %v438, %v435
      %v451 = vpack.c.bf16 %v439, %v436
      %v452 = vpack.c.bf16 %v443, %v440
      %v453 = vpack.c.bf16 %v444, %v441
      %v454 = vpack.c.bf16 %v445, %v442
      %v455 = vpack.c.bf16 %v446, %v446
      %v456 = vpack.c.bf16 %v447, %v447
      %v457 = vpack.c.bf16 %v448, %v448
      %v458 = vld [vmem:[%s4] sm:$0xf]
      %460 = vset.pattern.permute.xlu0 0
      %461 = vperm.xlu0 %460, %v458
      %v462 = vpop.permute.xlu0 %461
      %vm464 = vcmask 293888
      %v466 = vsel %vm464, %v433, 0
      %vm468 = vcmask 1041408
      %v470 = vsel %vm468, %v455, 0
      %v473 = vsel %vm468, %v456, 0
      %v476 = vsel %vm468, %v457, 0
      %478 = vmatprep.subr.bf16.mxu0 %v450
      %479 = vmatpush1.bf16.msra.mxu0 %v449
      %480 = vmatprep.subr.bf16.mxu0 %v453
      %481 = vmatpush1.bf16.msra.mxu0 %v452
      %482 = vmatprep.subr.bf16.mxu0 %v473
      %483 = vmatpush1.bf16.msra.mxu0 %v470
      %484 = vmatprep.subr.bf16.mxu0 0
      %485 = vmatpush1.bf16.msra.mxu0 0
      %486 = vmatprep.subr.bf16.mxu0 0
      %487 = vmatpush1.bf16.msra.mxu0 0
      %488 = vmatprep.subr.bf16.mxu0 0
      %489 = vmatpush1.bf16.msra.mxu0 0
      %490 = vmatprep.subr.bf16.mxu0 0
      %491 = vmatpush1.bf16.msra.mxu0 0
      %492 = vmatprep.subr.bf16.mxu0 0
      %493 = vmatpush1.bf16.msra.mxu0 0
      %494 = vmatprep.subr.bf16.mxu0 0
      %495 = vmatpush1.bf16.msra.mxu0 0
      %496 = vmatprep.subr.bf16.mxu0 0
      %497 = vmatpush1.bf16.msra.mxu0 0
      %498 = vmatprep.subr.bf16.mxu0 0
      %499 = vmatpush1.bf16.msra.mxu0 0
      %500 = vmatprep.subr.bf16.mxu0 0
      %501 = vmatpush1.bf16.msra.mxu0 0
      %502 = vmatprep.subr.bf16.mxu0 0
      %503 = vmatpush1.bf16.msra.mxu0 0
      %504 = vmatprep.subr.bf16.mxu0 0
      %505 = vmatpush1.bf16.msra.mxu0 0
      %506 = vmatprep.subr.bf16.mxu0 0
      %507 = vmatpush1.bf16.msra.mxu0 0
      %508 = vmatprep.subr.bf16.mxu0 0
      %509 = vmatpush1.bf16.msra.mxu0 0
      %510 = vmatprep.mubr.bf16.mxu0 0
      %511 = vmatmul.mubr.bf16.gmra.mrb[0].mxu0 %v466
      %v512 = vpop.f32.mrb[0].mxu0
      %v513 = vadd.f32 %v462, %v512
      %v514 = vpop.f32.mrb[0].mxu0
      %v515 = vadd.f32 %v462, %v514
      %v516 = vpop.f32.mrb[0].mxu0
      %v517 = vpop.f32.mrb[0].mxu0
      %518 = vdwg.mxu0
      %519 = vmatprep.subr.bf16.mxu0 0
      %520 = vmatpush1.bf16.msra.mxu0 %v451
      %521 = vmatprep.subr.bf16.mxu0 0
      %522 = vmatpush1.bf16.msra.mxu0 %v454
      %523 = vmatprep.subr.bf16.mxu0 0
      %524 = vmatpush1.bf16.msra.mxu0 %v476
      %525 = vmatprep.subr.bf16.mxu0 0
      %526 = vmatpush1.bf16.msra.mxu0 0
      %527 = vmatprep.subr.bf16.mxu0 0
      %528 = vmatpush1.bf16.msra.mxu0 0
      %529 = vmatprep.subr.bf16.mxu0 0
      %530 = vmatpush1.bf16.msra.mxu0 0
      %531 = vmatprep.subr.bf16.mxu0 0
      %532 = vmatpush1.bf16.msra.mxu0 0
      %533 = vmatprep.subr.bf16.mxu0 0
      %534 = vmatpush1.bf16.msra.mxu0 0
      %535 = vmatprep.subr.bf16.mxu0 0
      %536 = vmatpush1.bf16.msra.mxu0 0
      %537 = vmatprep.subr.bf16.mxu0 0
      %538 = vmatpush1.bf16.msra.mxu0 0
      %539 = vmatprep.subr.bf16.mxu0 0
      %540 = vmatpush1.bf16.msra.mxu0 0
      %541 = vmatprep.subr.bf16.mxu0 0
      %542 = vmatpush1.bf16.msra.mxu0 0
      %543 = vmatprep.subr.bf16.mxu0 0
      %544 = vmatpush1.bf16.msra.mxu0 0
      %545 = vmatprep.subr.bf16.mxu0 0
      %546 = vmatpush1.bf16.msra.mxu0 0
      %547 = vmatprep.subr.bf16.mxu0 0
      %548 = vmatpush1.bf16.msra.mxu0 0
      %549 = vmatprep.subr.bf16.mxu0 0
      %550 = vmatpush1.bf16.msra.mxu0 0
      %551 = vmatprep.mubr.bf16.mxu0 0
      %552 = vmatmul.mubr.bf16.gmra.mrb[0].mxu0 %v466
      %v553 = vpop.f32.mrb[0].mxu0
      %v554 = vadd.f32 %v462, %v553
      %v555 = vpop.f32.mrb[0].mxu0
      %v556 = vpop.f32.mrb[0].mxu0
      %v557 = vpop.f32.mrb[0].mxu0
      %558 = vdwg.mxu0
      %v559 = vmax.f32 %v513, 0.0
      %v560 = vmax.f32 %v515, 0.0
      %v561 = vmax.f32 %v554, 0.0
      %v562 = vld [vmem:[%s2] sm:$0x7]
      %v564 = vlaneseq
      %v565 = vshrl.u32 %v564, 7
      %v566 = vsub.s32 0, %v565
      %v567 = vrot.slane %v562, %v566
      %v568 = vlaneseq
      %v569 = vshrl.u32 %v568, 7
      %v570 = vsub.s32 1, %v569
      %v571 = vrot.slane %v562, %v570
      %v572 = vlaneseq
      %v573 = vshrl.u32 %v572, 7
      %v574 = vsub.s32 2, %v573
      %v575 = vrot.slane %v562, %v574
      %v579 = vmul.f32 %v559, %v567
      %v580 = vmul.f32 %v560, %v571
      %v581 = vmul.f32 %v561, %v575
      %vm582 = vcmask 150528
      %583 = vst.msk [vmem:[#allocation3] sm:$0xf] %vm582, 0.0
      %vm584 = vcmask 568712
      %585 = vst.msk [vmem:[#allocation3 + $0x8] sm:$0xf] %vm584, 0.0
      %v589 = vcombine.low %v579, %v580
      %590 = vrot.lane.b32.xlu0 %v589, 19
      %v591 = vpop.permute.xlu0 %590
      %592 = vrot.lane.b32.xlu0 %v581, 19
      %v593 = vpop.permute.xlu0 %592
      %v594 = vrot.slane %v591, 4
      %vm595 = vcmask 154624
      %v596 = vsel %vm595, %v594, %v591
      %v597 = vsel %vm595, %v594, %v593
      %vm600 = vcmask 1043608
      %vm601 = vcmask 1047556
      %vm602 = vmor %vm601, %vm600
      %603 = vst.msk [vmem:[#allocation3] sm:$0xff] %vm602, %v596
      %vm604 = vcmask 396288
      %605 = vst.msk [vmem:[#allocation3 + $0x8] sm:$0xf] %vm604, %v597
      %v606 = vld [vmem:[#allocation3] sm:$0xff]
      %v607 = vld [vmem:[#allocation3 + $0x8] sm:$0xf]
      %v609 = vcombine.high %v606, %v606
      %611 = vst [vmem:[#allocation2] sm:$0xf] %v606
      %612 = vst [vmem:[#allocation2 + $0x8] sm:$0xf] %v609
      %vm613 = vcmask 257024
      %614 = vst.msk [vmem:[#allocation2 + $0x10] sm:$0xf] %vm613, %v607
      %v615 = vld [vmem:[#allocation3] sm:$0xff]
      %v616 = vld [vmem:[#allocation3 + $0x8] sm:$0xf]
      %v619 = vcombine.low %v615, %v615
      %v620 = vcombine.low %v616, %v616
      %621 = vrot.lane.b32.xlu0 %v619, 127
      %v622 = vpop.permute.xlu0 %621
      %623 = vrot.lane.b32.xlu0 %v615, 127
      %v624 = vpop.permute.xlu0 %623
      %625 = vrot.lane.b32.xlu0 %v620, 127
      %v626 = vpop.permute.xlu0 %625
      %v627 = vsel %vm318, %v622, %v624
      %v628 = vsel %vm318, %v624, %v626
      %632 = vst [vmem:[#allocation2] sm:$0xf0] %v627
      %633 = vst [vmem:[#allocation2 + $0x8] sm:$0xf0] %v628
      %vm634 = vcmask 261124
      %635 = vst.msk [vmem:[#allocation2 + $0x10] sm:$0xf0] %vm634, %v626
      %v636 = vld [vmem:[#allocation3] sm:$0xff]
      %v637 = vld [vmem:[#allocation3 + $0x8] sm:$0xf]
      %v640 = vcombine.high %v636, %v636
      %641 = vrot.lane.b32.xlu0 %v636, 126
      %v642 = vpop.permute.xlu0 %641
      %643 = vrot.lane.b32.xlu0 %v640, 126
      %v644 = vpop.permute.xlu0 %643
      %645 = vrot.lane.b32.xlu0 %v637, 126
      %v646 = vpop.permute.xlu0 %645
      %v647 = vsel %vm334, %v642, %v644
      %v648 = vsel %vm334, %v644, %v646
      %652 = vst [vmem:[#allocation2 + $0x18] sm:$0xf] %v647
      %653 = vst [vmem:[#allocation2 + $0x20] sm:$0xf] %v648
      %654 = vst.msk [vmem:[#allocation2 + $0x28] sm:$0xf] %vm613, %v646
      %v655 = vld [vmem:[#allocation3] sm:$0xff]
      %v656 = vld [vmem:[#allocation3 + $0x8] sm:$0xf]
      %v659 = vcombine.low %v655, %v655
      %v660 = vcombine.low %v656, %v656
      %661 = vrot.lane.b32.xlu0 %v659, 110
      %v662 = vpop.permute.xlu0 %661
      %663 = vrot.lane.b32.xlu0 %v655, 110
      %v664 = vpop.permute.xlu0 %663
      %665 = vrot.lane.b32.xlu0 %v660, 110
      %v666 = vpop.permute.xlu0 %665
      %v667 = vsel %vm349, %v662, %v664
      %v668 = vsel %vm349, %v664, %v666
      %672 = vst [vmem:[#allocation2 + $0x18] sm:$0xf0] %v667
      %673 = vst [vmem:[#allocation2 + $0x20] sm:$0xf0] %v668
      %674 = vst.msk [vmem:[#allocation2 + $0x28] sm:$0xf0] %vm634, %v666
      %v675 = vld [vmem:[#allocation3] sm:$0xff]
      %v676 = vld [vmem:[#allocation3 + $0x8] sm:$0xf]
      %v679 = vcombine.high %v675, %v675
      %680 = vrot.lane.b32.xlu0 %v675, 109
      %v681 = vpop.permute.xlu0 %680
      %682 = vrot.lane.b32.xlu0 %v679, 109
      %v683 = vpop.permute.xlu0 %682
      %684 = vrot.lane.b32.xlu0 %v676, 109
      %v685 = vpop.permute.xlu0 %684
      %v686 = vsel %vm364, %v681, %v683
      %v687 = vsel %vm364, %v683, %v685
      %691 = vst [vmem:[#allocation2 + $0x30] sm:$0xf] %v686
      %692 = vst [vmem:[#allocation2 + $0x38] sm:$0xf] %v687
      %693 = vst.msk [vmem:[#allocation2 + $0x40] sm:$0xf] %vm613, %v685
      %v694 = vld [vmem:[#allocation3] sm:$0xff]
      %v695 = vld [vmem:[#allocation3 + $0x8] sm:$0xf]
      %v698 = vcombine.low %v694, %v694
      %v699 = vcombine.low %v695, %v695
      %700 = vrot.lane.b32.xlu0 %v698, 108
      %v701 = vpop.permute.xlu0 %700
      %702 = vrot.lane.b32.xlu0 %v694, 108
      %v703 = vpop.permute.xlu0 %702
      %704 = vrot.lane.b32.xlu0 %v699, 108
      %v705 = vpop.permute.xlu0 %704
      %v706 = vsel %vm379, %v701, %v703
      %v707 = vsel %vm379, %v703, %v705
      %711 = vst [vmem:[#allocation2 + $0x30] sm:$0xf0] %v706
      %712 = vst [vmem:[#allocation2 + $0x38] sm:$0xf0] %v707
      %713 = vst.msk [vmem:[#allocation2 + $0x40] sm:$0xf0] %vm634, %v705
      %v714 = vld [vmem:[#allocation3] sm:$0xff]
      %v715 = vld [vmem:[#allocation3 + $0x8] sm:$0xf]
      %v718 = vcombine.high %v714, %v714
      %719 = vrot.lane.b32.xlu0 %v714, 92
      %v720 = vpop.permute.xlu0 %719
      %721 = vrot.lane.b32.xlu0 %v718, 92
      %v722 = vpop.permute.xlu0 %721
      %723 = vrot.lane.b32.xlu0 %v715, 92
      %v724 = vpop.permute.xlu0 %723
      %v725 = vsel %vm394, %v720, %v722
      %v726 = vsel %vm394, %v722, %v724
      %730 = vst [vmem:[#allocation2 + $0x48] sm:$0xf] %v725
      %731 = vst [vmem:[#allocation2 + $0x50] sm:$0xf] %v726
      %732 = vst.msk [vmem:[#allocation2 + $0x58] sm:$0xf] %vm613, %v724
      %v733 = vld [vmem:[#allocation3] sm:$0xff]
      %v734 = vld [vmem:[#allocation3 + $0x8] sm:$0xf]
      %v737 = vcombine.low %v733, %v733
      %v738 = vcombine.low %v734, %v734
      %739 = vrot.lane.b32.xlu0 %v737, 91
      %v740 = vpop.permute.xlu0 %739
      %741 = vrot.lane.b32.xlu0 %v733, 91
      %v742 = vpop.permute.xlu0 %741
      %743 = vrot.lane.b32.xlu0 %v738, 91
      %v744 = vpop.permute.xlu0 %743
      %v745 = vsel %vm409, %v740, %v742
      %v746 = vsel %vm409, %v742, %v744
      %750 = vst [vmem:[#allocation2 + $0x48] sm:$0xf0] %v745
      %751 = vst [vmem:[#allocation2 + $0x50] sm:$0xf0] %v746
      %752 = vst.msk [vmem:[#allocation2 + $0x58] sm:$0xf0] %vm634, %v744
      %v753 = vld [vmem:[#allocation3] sm:$0xff]
      %v754 = vld [vmem:[#allocation3 + $0x8] sm:$0xf]
      %v757 = vcombine.high %v753, %v753
      %758 = vrot.lane.b32.xlu0 %v753, 90
      %v759 = vpop.permute.xlu0 %758
      %760 = vrot.lane.b32.xlu0 %v757, 90
      %v761 = vpop.permute.xlu0 %760
      %762 = vrot.lane.b32.xlu0 %v754, 90
      %v763 = vpop.permute.xlu0 %762
      %v764 = vsel %vm424, %v759, %v761
      %v765 = vsel %vm424, %v761, %v763
      %769 = vst [vmem:[#allocation2 + $0x60] sm:$0xf] %v764
      %770 = vst [vmem:[#allocation2 + $0x68] sm:$0xf] %v765
      %771 = vst.msk [vmem:[#allocation2 + $0x70] sm:$0xf] %vm613, %v763
      %v772 = vld [vmem:[%s5] sm:$0x3]
      %v773 = vld [vmem:[#allocation2] sm:$0xff]
      %v774 = vld [vmem:[#allocation2 + $0x8] sm:$0xff]
      %v775 = vld [vmem:[#allocation2 + $0x10] sm:$0xff]
      %v776 = vld [vmem:[#allocation2 + $0x18] sm:$0xff]
      %v777 = vld [vmem:[#allocation2 + $0x20] sm:$0xff]
      %v778 = vld [vmem:[#allocation2 + $0x28] sm:$0xff]
      %v779 = vld [vmem:[#allocation2 + $0x30] sm:$0xff]
      %v780 = vld [vmem:[#allocation2 + $0x38] sm:$0xff]
      %v781 = vld [vmem:[#allocation2 + $0x40] sm:$0xff]
      %v782 = vld [vmem:[#allocation2 + $0x48] sm:$0xff]
      %v783 = vld [vmem:[#allocation2 + $0x50] sm:$0xff]
      %v784 = vld [vmem:[#allocation2 + $0x58] sm:$0xff]
      %v785 = vld [vmem:[#allocation2 + $0x60] sm:$0xf]
      %v786 = vld [vmem:[#allocation2 + $0x68] sm:$0xf]
      %v787 = vld [vmem:[#allocation2 + $0x70] sm:$0xf]
      %v788 = vpack.c.bf16 %v776, %v773
      %v789 = vpack.c.bf16 %v777, %v774
      %v790 = vpack.c.bf16 %v778, %v775
      %v791 = vpack.c.bf16 %v782, %v779
      %v792 = vpack.c.bf16 %v783, %v780
      %v793 = vpack.c.bf16 %v784, %v781
      %v794 = vpack.c.bf16 %v785, %v785
      %v795 = vpack.c.bf16 %v786, %v786
      %v796 = vpack.c.bf16 %v787, %v787
      %v797 = vld [vmem:[%s6] sm:$0xf]
      %799 = vset.pattern.permute.xlu0 0
      %800 = vperm.xlu0 %799, %v797
      %v801 = vpop.permute.xlu0 %800
      %v804 = vsel %vm464, %v772, 0
      %v807 = vsel %vm468, %v794, 0
      %v810 = vsel %vm468, %v795, 0
      %v813 = vsel %vm468, %v796, 0
      %815 = vmatprep.subr.bf16.mxu0 %v789
      %816 = vmatpush1.bf16.msra.mxu0 %v788
      %817 = vmatprep.subr.bf16.mxu0 %v792
      %818 = vmatpush1.bf16.msra.mxu0 %v791
      %819 = vmatprep.subr.bf16.mxu0 %v810
      %820 = vmatpush1.bf16.msra.mxu0 %v807
      %821 = vmatprep.subr.bf16.mxu0 0
      %822 = vmatpush1.bf16.msra.mxu0 0
      %823 = vmatprep.subr.bf16.mxu0 0
      %824 = vmatpush1.bf16.msra.mxu0 0
      %825 = vmatprep.subr.bf16.mxu0 0
      %826 = vmatpush1.bf16.msra.mxu0 0
      %827 = vmatprep.subr.bf16.mxu0 0
      %828 = vmatpush1.bf16.msra.mxu0 0
      %829 = vmatprep.subr.bf16.mxu0 0
      %830 = vmatpush1.bf16.msra.mxu0 0
      %831 = vmatprep.subr.bf16.mxu0 0
      %832 = vmatpush1.bf16.msra.mxu0 0
      %833 = vmatprep.subr.bf16.mxu0 0
      %834 = vmatpush1.bf16.msra.mxu0 0
      %835 = vmatprep.subr.bf16.mxu0 0
      %836 = vmatpush1.bf16.msra.mxu0 0
      %837 = vmatprep.subr.bf16.mxu0 0
      %838 = vmatpush1.bf16.msra.mxu0 0
      %839 = vmatprep.subr.bf16.mxu0 0
      %840 = vmatpush1.bf16.msra.mxu0 0
      %841 = vmatprep.subr.bf16.mxu0 0
      %842 = vmatpush1.bf16.msra.mxu0 0
      %843 = vmatprep.subr.bf16.mxu0 0
      %844 = vmatpush1.bf16.msra.mxu0 0
      %845 = vmatprep.subr.bf16.mxu0 0
      %846 = vmatpush1.bf16.msra.mxu0 0
      %847 = vmatprep.mubr.bf16.mxu0 0
      %848 = vmatmul.mubr.bf16.gmra.mrb[0].mxu0 %v804
      %v849 = vpop.f32.mrb[0].mxu0
      %v850 = vadd.f32 %v801, %v849
      %v851 = vpop.f32.mrb[0].mxu0
      %v852 = vadd.f32 %v801, %v851
      %v853 = vpop.f32.mrb[0].mxu0
      %v854 = vpop.f32.mrb[0].mxu0
      %855 = vdwg.mxu0
      %856 = vmatprep.subr.bf16.mxu0 0
      %857 = vmatpush1.bf16.msra.mxu0 %v790
      %858 = vmatprep.subr.bf16.mxu0 0
      %859 = vmatpush1.bf16.msra.mxu0 %v793
      %860 = vmatprep.subr.bf16.mxu0 0
      %861 = vmatpush1.bf16.msra.mxu0 %v813
      %862 = vmatprep.subr.bf16.mxu0 0
      %863 = vmatpush1.bf16.msra.mxu0 0
      %864 = vmatprep.subr.bf16.mxu0 0
      %865 = vmatpush1.bf16.msra.mxu0 0
      %866 = vmatprep.subr.bf16.mxu0 0
      %867 = vmatpush1.bf16.msra.mxu0 0
      %868 = vmatprep.subr.bf16.mxu0 0
      %869 = vmatpush1.bf16.msra.mxu0 0
      %870 = vmatprep.subr.bf16.mxu0 0
      %871 = vmatpush1.bf16.msra.mxu0 0
      %872 = vmatprep.subr.bf16.mxu0 0
      %873 = vmatpush1.bf16.msra.mxu0 0
      %874 = vmatprep.subr.bf16.mxu0 0
      %875 = vmatpush1.bf16.msra.mxu0 0
      %876 = vmatprep.subr.bf16.mxu0 0
      %877 = vmatpush1.bf16.msra.mxu0 0
      %878 = vmatprep.subr.bf16.mxu0 0
      %879 = vmatpush1.bf16.msra.mxu0 0
      %880 = vmatprep.subr.bf16.mxu0 0
      %881 = vmatpush1.bf16.msra.mxu0 0
      %882 = vmatprep.subr.bf16.mxu0 0
      %883 = vmatpush1.bf16.msra.mxu0 0
      %884 = vmatprep.subr.bf16.mxu0 0
      %885 = vmatpush1.bf16.msra.mxu0 0
      %886 = vmatprep.subr.bf16.mxu0 0
      %887 = vmatpush1.bf16.msra.mxu0 0
      %888 = vmatprep.mubr.bf16.mxu0 0
      %889 = vmatmul.mubr.bf16.gmra.mrb[0].mxu0 %v804
      %v890 = vpop.f32.mrb[0].mxu0
      %v891 = vadd.f32 %v801, %v890
      %v892 = vpop.f32.mrb[0].mxu0
      %v893 = vpop.f32.mrb[0].mxu0
      %v894 = vpop.f32.mrb[0].mxu0
      %895 = vdwg.mxu0
      %v896 = vld [vmem:[%s293] sm:$0xff]
      %v897 = vld [vmem:[%s293 + $0x8] sm:$0xf]
      %v899 = vcombine.high %v896, %v896
      %v901 = vadd.f32 %v850, %v896
      %v902 = vadd.f32 %v852, %v899
      %v903 = vadd.f32 %v891, %v897
      %v904 = vadd.f32 %v901, %v365
      %v905 = vadd.f32 %v902, %v366
      %v906 = vadd.f32 %v903, %v363
      %v909 = vcombine.low %v904, %v905
      %911 = vst [vmem:[%s298] sm:$0xff] %v909
      %912 = vst.msk [vmem:[%s298 + $0x8] sm:$0xf] %vm613, %v906
      %p913 = scmp.lt.s32.totalorder %s18, 1
      %s914 = scalar_select %p913, %s18, 1
      %s915 = smul.addr %s914, 3
      %s916 = smul.addr %s915, 4
      %s917 = scalar_lea.vmem %s7, %s916
      // Predicated region
      $region49: #{dblock_forward.5} parent=47 // pred_check
        %p918 = pneg %p193
      $region50: #{dblock_forward.5} parent=47 // pred_check_branch
        %920 = sbr.rel (%p918) target = $region52
      $region51: #{dblock_forward.5} parent=47 // pred_region
        _
      $region52: #{dblock_forward.5} parent=47 // pred_fallthru
        _
    $region48: #{dblock_forward.5} parent=5 // pred_fallthru
      _
    %p921 = scmp.le.s32.totalorder 2, %s13
    // Predicated region
    $region53: #{dblock_forward.5} parent=5 // pred_check
      %p922 = pneg %p921
    $region54: #{dblock_forward.5} parent=5 // pred_check_branch
      %924 = sbr.rel (%p922) target = $region56
    $region55: #{dblock_forward.5} parent=5 // pred_region
      %s925 = ssub.s32 %s13, 2
      // Predicated region
      $region57: #{dblock_forward.5} parent=55 // pred_check
        %p926 = pneg %p199
      $region58: #{dblock_forward.5} parent=55 // pred_check_branch
        %928 = sbr.rel (%p926) target = $region60
      $region59: #{dblock_forward.5} parent=55 // pred_region
        %p929 = scmp.lt.s32.totalorder %s19, 1
        %s930 = scalar_select %p929, %s19, 1
        %s931 = smul.addr %s930, 3
        %s932 = smul.addr %s931, 4
        %s933 = scalar_lea.vmem %s7, %s932
      $region60: #{dblock_forward.5} parent=55 // pred_fallthru
        _
    $region56: #{dblock_forward.5} parent=5 // pred_fallthru
      _
  $region6: #{dblock_forward.5} parent=0 // loop_footer
    %s17 = sadd.s32 1, %s13
  $region7: #{dblock_forward.5} parent=0 // loop_footer_branch
    %12 = sbr.rel target = $region3
  $region8: #{dblock_forward.5} parent=0 // loop_exit
    _

</llo_original>
